<compile_context>
chip_gen: v7x
topology: tpu7x:2x2x1
jax: 0.10.0
libtpu: 0.0.40
codegen_flags: <defaults>
</compile_context>

<pallas_src>
import jax
import jax.numpy as jnp
import numpy as np
from jax.experimental import pallas as pl
from jax.experimental.pallas import tpu as pltpu

INPUT_SIZE = 3
HIDDEN = 50
OUTPUT = 1
SEQ_LEN = 8

GATE_PAD = 128                 # each gate padded to one full lane width
NGATES = 4
GSTACK = NGATES * GATE_PAD     # 512 stacked-gate lanes
K_PAD = 128                    # padded contraction dim (>= HIDDEN and >= INPUT_SIZE)
SIG_LANES = 3 * GATE_PAD       # contiguous i|f|o slab (sigmoid gates)

# torch nn.LSTM row order is (i, f, g, o); kernel lane order is (i, f, o, g)
# so the sigmoid gates form one contiguous 3*128-lane slab and tanh gets the last 128.
_TORCH_GATE_FOR_SLOT = (0, 1, 3, 2)


def lstm_kernel(x_ref, wih_ref, whh_ref, b_ref, wlin_ref, blin_ref, out_ref):
    # Hoisted, non-recurrent work: input projection for all timesteps + folded bias.
    # Note: i/f/o columns of wih/whh/b are pre-scaled by 0.5 at pack time so the
    # sigmoid gates can be evaluated with a single tanh below.
    xw = jnp.dot(x_ref[...], wih_ref[...],
                 preferred_element_type=jnp.float32) + b_ref[...]     # (SEQ_LEN, 512)
    whh = whh_ref[...]                                                # (128, 512)

    h = jnp.zeros((1, K_PAD), jnp.float32)
    c = jnp.zeros((1, K_PAD), jnp.float32)

    # Fully unrolled recurrence: one stacked matmul + one gate tanh per step.
    for t in range(SEQ_LEN):
        gates = xw[t:t + 1, :] + jnp.dot(h, whh,
                                         preferred_element_type=jnp.float32)  # (1, 512)
        t_all = jnp.tanh(gates)                       # one EUP slab over all 4 gates
        ifo = 0.5 * t_all[:, :SIG_LANES] + 0.5        # sigmoid(z) = 0.5*tanh(z/2)+0.5
        g_ = t_all[:, SIG_LANES:]                     # candidate (true tanh gate)
        i = ifo[:, 0 * GATE_PAD:1 * GATE_PAD]
        f = ifo[:, 1 * GATE_PAD:2 * GATE_PAD]
        o = ifo[:, 2 * GATE_PAD:3 * GATE_PAD]
        c = f * c + i * g_
        h = o * jnp.tanh(c)

    out_ref[...] = (jnp.dot(h, wlin_ref[...], preferred_element_type=jnp.float32)
                    + blin_ref[...])


def lstm_forward(x, wih_p, whh_p, b_p, wlin_p, blin_p):
    # Pad the feature axis to a full 128-lane block (layout plumbing only;
    # the padded rows of wih are zero so results are unchanged).
    x_p = jnp.zeros((x.shape[0], K_PAD), jnp.float32).at[:, :INPUT_SIZE].set(x)
    vmem = lambda: pl.BlockSpec(memory_space=pltpu.MemorySpace.VMEM)
    out = pl.pallas_call(
        lstm_kernel,
        out_shape=jax.ShapeDtypeStruct((1, OUTPUT), jnp.float32),
        in_specs=[vmem() for _ in range(6)],
        out_specs=vmem(),
    )(x_p, wih_p, whh_p, b_p, wlin_p, blin_p)
    # matches `predictions[-1]` in the PyTorch module: shape (output_size,)
    return out[0]


def make_params(key):
    """torch-layout parameters with torch default / xavier inits."""
    ks = jax.random.split(key, 6)
    std = 1.0 / np.sqrt(HIDDEN)
    w_ih = jax.random.uniform(ks[0], (4 * HIDDEN, INPUT_SIZE), jnp.float32, -std, std)
    w_hh = jax.random.uniform(ks[1], (4 * HIDDEN, HIDDEN), jnp.float32, -std, std)
    b_ih = jax.random.uniform(ks[2], (4 * HIDDEN,), jnp.float32, -std, std)
    b_hh = jax.random.uniform(ks[3], (4 * HIDDEN,), jnp.float32, -std, std)
    w_lin = jax.random.normal(ks[4], (OUTPUT, HIDDEN), jnp.float32) * np.sqrt(2.0 / (HIDDEN + OUTPUT))
    b_lin = jax.random.uniform(ks[5], (OUTPUT,), jnp.float32, -std, std)
    return w_ih, w_hh, b_ih, b_hh, w_lin, b_lin


def pack_params(w_ih, w_hh, b_ih, b_hh, w_lin, b_lin):
    """Rearrange torch-layout params into the padded, gate-stacked kernel layout.

    The i/f/o (sigmoid) gate columns are pre-scaled by 0.5 so the kernel can use
    sigmoid(z) = 0.5*tanh(z/2) + 0.5 with a single tanh over the whole gate slab.
    """
    wih4 = np.asarray(w_ih).reshape(4, HIDDEN, INPUT_SIZE)   # torch gate order i,f,g,o
    whh4 = np.asarray(w_hh).reshape(4, HIDDEN, HIDDEN)
    b4 = (np.asarray(b_ih) + np.asarray(b_hh)).reshape(4, HIDDEN)

    wih_p = np.zeros((K_PAD, GSTACK), np.float32)
    whh_p = np.zeros((K_PAD, GSTACK), np.float32)
    b_p = np.zeros((1, GSTACK), np.float32)
    for slot, g in enumerate(_TORCH_GATE_FOR_SLOT):
        lo = slot * GATE_PAD
        scale = 0.5 if slot < 3 else 1.0   # slots 0..2 are the sigmoid gates (i,f,o)
        wih_p[:INPUT_SIZE, lo:lo + HIDDEN] = scale * wih4[g].T
        whh_p[:HIDDEN, lo:lo + HIDDEN] = scale * whh4[g].T
        b_p[0, lo:lo + HIDDEN] = scale * b4[g]

    wlin_p = np.zeros((K_PAD, OUTPUT), np.float32)
    wlin_p[:HIDDEN, :] = np.asarray(w_lin).T
    blin_p = np.asarray(b_lin).reshape(1, OUTPUT).astype(np.float32)

    return (jnp.asarray(wih_p), jnp.asarray(whh_p), jnp.asarray(b_p),
            jnp.asarray(wlin_p), jnp.asarray(blin_p))


def ref_forward(x, w_ih, w_hh, b_ih, b_hh, w_lin, b_lin):
    """Pure-JAX reference of the torch forward pass (torch gate order i,f,g,o)."""
    h = jnp.zeros((1, HIDDEN), jnp.float32)
    c = jnp.zeros((1, HIDDEN), jnp.float32)
    for t in range(x.shape[0]):
        xt = x[t:t + 1]
        z = xt @ w_ih.T + h @ w_hh.T + b_ih + b_hh
        i = jax.nn.sigmoid(z[:, 0:HIDDEN])
        f = jax.nn.sigmoid(z[:, HIDDEN:2 * HIDDEN])
        g = jnp.tanh(z[:, 2 * HIDDEN:3 * HIDDEN])
        o = jax.nn.sigmoid(z[:, 3 * HIDDEN:4 * HIDDEN])
        c = f * c + i * g
        h = o * jnp.tanh(c)
    return (h @ w_lin.T + b_lin)[0]


# TODO(synk): the PyTorch module carries self.hidden_cell across forward() calls;
# this kernel implements a single forward pass from the zero initial state.

if __name__ == "__main__":
    key = jax.random.PRNGKey(0)
    k_param, k_x = jax.random.split(key)
    raw_params = make_params(k_param)
    packed = pack_params(*raw_params)
    x = jax.random.normal(k_x, (SEQ_LEN, INPUT_SIZE), jnp.float32)

    out = jax.block_until_ready(lstm_forward(x, *packed))

    ref = ref_forward(x, *raw_params)
    np.testing.assert_allclose(np.asarray(out), np.asarray(ref), rtol=1e-4, atol=2e-5)

    print("KERNEL_OK")
</pallas_src>

<mosaic_0001>
module attributes {stable_mosaic.version = 11 : i64} {
  func.func @lstm_kernel(%arg0: memref<8x128xf32, #tpu.memory_space<vmem>>, %arg1: memref<128x512xf32, #tpu.memory_space<vmem>>, %arg2: memref<128x512xf32, #tpu.memory_space<vmem>>, %arg3: memref<1x512xf32, #tpu.memory_space<vmem>>, %arg4: memref<128x1xf32, #tpu.memory_space<vmem>>, %arg5: memref<1x1xf32, #tpu.memory_space<vmem>>, %arg6: memref<1x1xf32, #tpu.memory_space<vmem>>) attributes {dimension_semantics = [], scalar_prefetch = 0 : i64, scratch_operands = 0 : i64, tpu.core_type = #tpu.core_type<tc>} {
    %c0 = arith.constant 0 : index
    %c0_0 = arith.constant 0 : index
    %0 = vector.load %arg0[%c0, %c0_0] : memref<8x128xf32, #tpu.memory_space<vmem>>, vector<8x128xf32>
    %c0_1 = arith.constant 0 : index
    %c0_2 = arith.constant 0 : index
    %1 = vector.load %arg1[%c0_1, %c0_2] : memref<128x512xf32, #tpu.memory_space<vmem>>, vector<128x512xf32>
    %cst = arith.constant dense<0.000000e+00> : vector<8x512xf32>
    %2 = tpu.matmul %0, %1, %cst {dimension_numbers = #tpu.dot_dimension_numbers<[1], [0], [0], [1], [0, 0, 1, 1], [], []>} : vector<8x128xf32>, vector<128x512xf32>, vector<8x512xf32> -> vector<8x512xf32>
    %c0_3 = arith.constant 0 : index
    %c0_4 = arith.constant 0 : index
    %3 = vector.load %arg3[%c0_3, %c0_4] : memref<1x512xf32, #tpu.memory_space<vmem>>, vector<1x512xf32>
    %4 = vector.broadcast %3 : vector<1x512xf32> to vector<8x512xf32>
    %5 = arith.addf %2, %4 : vector<8x512xf32>
    %c0_5 = arith.constant 0 : index
    %c0_6 = arith.constant 0 : index
    %6 = vector.load %arg2[%c0_5, %c0_6] : memref<128x512xf32, #tpu.memory_space<vmem>>, vector<128x512xf32>
    %cst_7 = arith.constant 0.000000e+00 : f32
    %7 = vector.broadcast %cst_7 : f32 to vector<1x128xf32>
    %cst_8 = arith.constant 0.000000e+00 : f32
    %8 = vector.broadcast %cst_8 : f32 to vector<1x128xf32>
    %9 = vector.extract_strided_slice %5 {offsets = [0, 0], sizes = [1, 512], strides = [1, 1]} : vector<8x512xf32> to vector<1x512xf32>
    %cst_9 = arith.constant dense<0.000000e+00> : vector<1x512xf32>
    %10 = tpu.matmul %7, %6, %cst_9 {dimension_numbers = #tpu.dot_dimension_numbers<[1], [0], [0], [1], [0, 0, 1, 1], [], []>} : vector<1x128xf32>, vector<128x512xf32>, vector<1x512xf32> -> vector<1x512xf32>
    %11 = arith.addf %9, %10 : vector<1x512xf32>
    %12 = math.tanh %11 : vector<1x512xf32>
    %13 = vector.extract_strided_slice %12 {offsets = [0, 0], sizes = [1, 384], strides = [1, 1]} : vector<1x512xf32> to vector<1x384xf32>
    %cst_10 = arith.constant 5.000000e-01 : f32
    %14 = vector.broadcast %cst_10 : f32 to vector<1x384xf32>
    %15 = arith.mulf %14, %13 : vector<1x384xf32>
    %cst_11 = arith.constant 5.000000e-01 : f32
    %16 = vector.broadcast %cst_11 : f32 to vector<1x384xf32>
    %17 = arith.addf %15, %16 : vector<1x384xf32>
    %18 = vector.extract_strided_slice %12 {offsets = [0, 384], sizes = [1, 128], strides = [1, 1]} : vector<1x512xf32> to vector<1x128xf32>
    %19 = vector.extract_strided_slice %17 {offsets = [0, 0], sizes = [1, 128], strides = [1, 1]} : vector<1x384xf32> to vector<1x128xf32>
    %20 = vector.extract_strided_slice %17 {offsets = [0, 128], sizes = [1, 128], strides = [1, 1]} : vector<1x384xf32> to vector<1x128xf32>
    %21 = vector.extract_strided_slice %17 {offsets = [0, 256], sizes = [1, 128], strides = [1, 1]} : vector<1x384xf32> to vector<1x128xf32>
    %22 = arith.mulf %20, %8 : vector<1x128xf32>
    %23 = arith.mulf %19, %18 : vector<1x128xf32>
    %24 = arith.addf %22, %23 : vector<1x128xf32>
    %25 = math.tanh %24 : vector<1x128xf32>
    %26 = arith.mulf %21, %25 : vector<1x128xf32>
    %27 = vector.extract_strided_slice %5 {offsets = [1, 0], sizes = [1, 512], strides = [1, 1]} : vector<8x512xf32> to vector<1x512xf32>
    %cst_12 = arith.constant dense<0.000000e+00> : vector<1x512xf32>
    %28 = tpu.matmul %26, %6, %cst_12 {dimension_numbers = #tpu.dot_dimension_numbers<[1], [0], [0], [1], [0, 0, 1, 1], [], []>} : vector<1x128xf32>, vector<128x512xf32>, vector<1x512xf32> -> vector<1x512xf32>
    %29 = arith.addf %27, %28 : vector<1x512xf32>
    %30 = math.tanh %29 : vector<1x512xf32>
    %31 = vector.extract_strided_slice %30 {offsets = [0, 0], sizes = [1, 384], strides = [1, 1]} : vector<1x512xf32> to vector<1x384xf32>
    %cst_13 = arith.constant 5.000000e-01 : f32
    %32 = vector.broadcast %cst_13 : f32 to vector<1x384xf32>
    %33 = arith.mulf %32, %31 : vector<1x384xf32>
    %cst_14 = arith.constant 5.000000e-01 : f32
    %34 = vector.broadcast %cst_14 : f32 to vector<1x384xf32>
    %35 = arith.addf %33, %34 : vector<1x384xf32>
    %36 = vector.extract_strided_slice %30 {offsets = [0, 384], sizes = [1, 128], strides = [1, 1]} : vector<1x512xf32> to vector<1x128xf32>
    %37 = vector.extract_strided_slice %35 {offsets = [0, 0], sizes = [1, 128], strides = [1, 1]} : vector<1x384xf32> to vector<1x128xf32>
    %38 = vector.extract_strided_slice %35 {offsets = [0, 128], sizes = [1, 128], strides = [1, 1]} : vector<1x384xf32> to vector<1x128xf32>
    %39 = vector.extract_strided_slice %35 {offsets = [0, 256], sizes = [1, 128], strides = [1, 1]} : vector<1x384xf32> to vector<1x128xf32>
    %40 = arith.mulf %38, %24 : vector<1x128xf32>
    %41 = arith.mulf %37, %36 : vector<1x128xf32>
    %42 = arith.addf %40, %41 : vector<1x128xf32>
    %43 = math.tanh %42 : vector<1x128xf32>
    %44 = arith.mulf %39, %43 : vector<1x128xf32>
    %45 = vector.extract_strided_slice %5 {offsets = [2, 0], sizes = [1, 512], strides = [1, 1]} : vector<8x512xf32> to vector<1x512xf32>
    %cst_15 = arith.constant dense<0.000000e+00> : vector<1x512xf32>
    %46 = tpu.matmul %44, %6, %cst_15 {dimension_numbers = #tpu.dot_dimension_numbers<[1], [0], [0], [1], [0, 0, 1, 1], [], []>} : vector<1x128xf32>, vector<128x512xf32>, vector<1x512xf32> -> vector<1x512xf32>
    %47 = arith.addf %45, %46 : vector<1x512xf32>
    %48 = math.tanh %47 : vector<1x512xf32>
    %49 = vector.extract_strided_slice %48 {offsets = [0, 0], sizes = [1, 384], strides = [1, 1]} : vector<1x512xf32> to vector<1x384xf32>
    %cst_16 = arith.constant 5.000000e-01 : f32
    %50 = vector.broadcast %cst_16 : f32 to vector<1x384xf32>
    %51 = arith.mulf %50, %49 : vector<1x384xf32>
    %cst_17 = arith.constant 5.000000e-01 : f32
    %52 = vector.broadcast %cst_17 : f32 to vector<1x384xf32>
    %53 = arith.addf %51, %52 : vector<1x384xf32>
    %54 = vector.extract_strided_slice %48 {offsets = [0, 384], sizes = [1, 128], strides = [1, 1]} : vector<1x512xf32> to vector<1x128xf32>
    %55 = vector.extract_strided_slice %53 {offsets = [0, 0], sizes = [1, 128], strides = [1, 1]} : vector<1x384xf32> to vector<1x128xf32>
    %56 = vector.extract_strided_slice %53 {offsets = [0, 128], sizes = [1, 128], strides = [1, 1]} : vector<1x384xf32> to vector<1x128xf32>
    %57 = vector.extract_strided_slice %53 {offsets = [0, 256], sizes = [1, 128], strides = [1, 1]} : vector<1x384xf32> to vector<1x128xf32>
    %58 = arith.mulf %56, %42 : vector<1x128xf32>
    %59 = arith.mulf %55, %54 : vector<1x128xf32>
    %60 = arith.addf %58, %59 : vector<1x128xf32>
    %61 = math.tanh %60 : vector<1x128xf32>
    %62 = arith.mulf %57, %61 : vector<1x128xf32>
    %63 = vector.extract_strided_slice %5 {offsets = [3, 0], sizes = [1, 512], strides = [1, 1]} : vector<8x512xf32> to vector<1x512xf32>
    %cst_18 = arith.constant dense<0.000000e+00> : vector<1x512xf32>
    %64 = tpu.matmul %62, %6, %cst_18 {dimension_numbers = #tpu.dot_dimension_numbers<[1], [0], [0], [1], [0, 0, 1, 1], [], []>} : vector<1x128xf32>, vector<128x512xf32>, vector<1x512xf32> -> vector<1x512xf32>
    %65 = arith.addf %63, %64 : vector<1x512xf32>
    %66 = math.tanh %65 : vector<1x512xf32>
    %67 = vector.extract_strided_slice %66 {offsets = [0, 0], sizes = [1, 384], strides = [1, 1]} : vector<1x512xf32> to vector<1x384xf32>
    %cst_19 = arith.constant 5.000000e-01 : f32
    %68 = vector.broadcast %cst_19 : f32 to vector<1x384xf32>
    %69 = arith.mulf %68, %67 : vector<1x384xf32>
    %cst_20 = arith.constant 5.000000e-01 : f32
    %70 = vector.broadcast %cst_20 : f32 to vector<1x384xf32>
    %71 = arith.addf %69, %70 : vector<1x384xf32>
    %72 = vector.extract_strided_slice %66 {offsets = [0, 384], sizes = [1, 128], strides = [1, 1]} : vector<1x512xf32> to vector<1x128xf32>
    %73 = vector.extract_strided_slice %71 {offsets = [0, 0], sizes = [1, 128], strides = [1, 1]} : vector<1x384xf32> to vector<1x128xf32>
    %74 = vector.extract_strided_slice %71 {offsets = [0, 128], sizes = [1, 128], strides = [1, 1]} : vector<1x384xf32> to vector<1x128xf32>
    %75 = vector.extract_strided_slice %71 {offsets = [0, 256], sizes = [1, 128], strides = [1, 1]} : vector<1x384xf32> to vector<1x128xf32>
    %76 = arith.mulf %74, %60 : vector<1x128xf32>
    %77 = arith.mulf %73, %72 : vector<1x128xf32>
    %78 = arith.addf %76, %77 : vector<1x128xf32>
    %79 = math.tanh %78 : vector<1x128xf32>
    %80 = arith.mulf %75, %79 : vector<1x128xf32>
    %81 = vector.extract_strided_slice %5 {offsets = [4, 0], sizes = [1, 512], strides = [1, 1]} : vector<8x512xf32> to vector<1x512xf32>
    %cst_21 = arith.constant dense<0.000000e+00> : vector<1x512xf32>
    %82 = tpu.matmul %80, %6, %cst_21 {dimension_numbers = #tpu.dot_dimension_numbers<[1], [0], [0], [1], [0, 0, 1, 1], [], []>} : vector<1x128xf32>, vector<128x512xf32>, vector<1x512xf32> -> vector<1x512xf32>
    %83 = arith.addf %81, %82 : vector<1x512xf32>
    %84 = math.tanh %83 : vector<1x512xf32>
    %85 = vector.extract_strided_slice %84 {offsets = [0, 0], sizes = [1, 384], strides = [1, 1]} : vector<1x512xf32> to vector<1x384xf32>
    %cst_22 = arith.constant 5.000000e-01 : f32
    %86 = vector.broadcast %cst_22 : f32 to vector<1x384xf32>
    %87 = arith.mulf %86, %85 : vector<1x384xf32>
    %cst_23 = arith.constant 5.000000e-01 : f32
    %88 = vector.broadcast %cst_23 : f32 to vector<1x384xf32>
    %89 = arith.addf %87, %88 : vector<1x384xf32>
    %90 = vector.extract_strided_slice %84 {offsets = [0, 384], sizes = [1, 128], strides = [1, 1]} : vector<1x512xf32> to vector<1x128xf32>
    %91 = vector.extract_strided_slice %89 {offsets = [0, 0], sizes = [1, 128], strides = [1, 1]} : vector<1x384xf32> to vector<1x128xf32>
    %92 = vector.extract_strided_slice %89 {offsets = [0, 128], sizes = [1, 128], strides = [1, 1]} : vector<1x384xf32> to vector<1x128xf32>
    %93 = vector.extract_strided_slice %89 {offsets = [0, 256], sizes = [1, 128], strides = [1, 1]} : vector<1x384xf32> to vector<1x128xf32>
    %94 = arith.mulf %92, %78 : vector<1x128xf32>
    %95 = arith.mulf %91, %90 : vector<1x128xf32>
    %96 = arith.addf %94, %95 : vector<1x128xf32>
    %97 = math.tanh %96 : vector<1x128xf32>
    %98 = arith.mulf %93, %97 : vector<1x128xf32>
    %99 = vector.extract_strided_slice %5 {offsets = [5, 0], sizes = [1, 512], strides = [1, 1]} : vector<8x512xf32> to vector<1x512xf32>
    %cst_24 = arith.constant dense<0.000000e+00> : vector<1x512xf32>
    %100 = tpu.matmul %98, %6, %cst_24 {dimension_numbers = #tpu.dot_dimension_numbers<[1], [0], [0], [1], [0, 0, 1, 1], [], []>} : vector<1x128xf32>, vector<128x512xf32>, vector<1x512xf32> -> vector<1x512xf32>
    %101 = arith.addf %99, %100 : vector<1x512xf32>
    %102 = math.tanh %101 : vector<1x512xf32>
    %103 = vector.extract_strided_slice %102 {offsets = [0, 0], sizes = [1, 384], strides = [1, 1]} : vector<1x512xf32> to vector<1x384xf32>
    %cst_25 = arith.constant 5.000000e-01 : f32
    %104 = vector.broadcast %cst_25 : f32 to vector<1x384xf32>
    %105 = arith.mulf %104, %103 : vector<1x384xf32>
    %cst_26 = arith.constant 5.000000e-01 : f32
    %106 = vector.broadcast %cst_26 : f32 to vector<1x384xf32>
    %107 = arith.addf %105, %106 : vector<1x384xf32>
    %108 = vector.extract_strided_slice %102 {offsets = [0, 384], sizes = [1, 128], strides = [1, 1]} : vector<1x512xf32> to vector<1x128xf32>
    %109 = vector.extract_strided_slice %107 {offsets = [0, 0], sizes = [1, 128], strides = [1, 1]} : vector<1x384xf32> to vector<1x128xf32>
    %110 = vector.extract_strided_slice %107 {offsets = [0, 128], sizes = [1, 128], strides = [1, 1]} : vector<1x384xf32> to vector<1x128xf32>
    %111 = vector.extract_strided_slice %107 {offsets = [0, 256], sizes = [1, 128], strides = [1, 1]} : vector<1x384xf32> to vector<1x128xf32>
    %112 = arith.mulf %110, %96 : vector<1x128xf32>
    %113 = arith.mulf %109, %108 : vector<1x128xf32>
    %114 = arith.addf %112, %113 : vector<1x128xf32>
    %115 = math.tanh %114 : vector<1x128xf32>
    %116 = arith.mulf %111, %115 : vector<1x128xf32>
    %117 = vector.extract_strided_slice %5 {offsets = [6, 0], sizes = [1, 512], strides = [1, 1]} : vector<8x512xf32> to vector<1x512xf32>
    %cst_27 = arith.constant dense<0.000000e+00> : vector<1x512xf32>
    %118 = tpu.matmul %116, %6, %cst_27 {dimension_numbers = #tpu.dot_dimension_numbers<[1], [0], [0], [1], [0, 0, 1, 1], [], []>} : vector<1x128xf32>, vector<128x512xf32>, vector<1x512xf32> -> vector<1x512xf32>
    %119 = arith.addf %117, %118 : vector<1x512xf32>
    %120 = math.tanh %119 : vector<1x512xf32>
    %121 = vector.extract_strided_slice %120 {offsets = [0, 0], sizes = [1, 384], strides = [1, 1]} : vector<1x512xf32> to vector<1x384xf32>
    %cst_28 = arith.constant 5.000000e-01 : f32
    %122 = vector.broadcast %cst_28 : f32 to vector<1x384xf32>
    %123 = arith.mulf %122, %121 : vector<1x384xf32>
    %cst_29 = arith.constant 5.000000e-01 : f32
    %124 = vector.broadcast %cst_29 : f32 to vector<1x384xf32>
    %125 = arith.addf %123, %124 : vector<1x384xf32>
    %126 = vector.extract_strided_slice %120 {offsets = [0, 384], sizes = [1, 128], strides = [1, 1]} : vector<1x512xf32> to vector<1x128xf32>
    %127 = vector.extract_strided_slice %125 {offsets = [0, 0], sizes = [1, 128], strides = [1, 1]} : vector<1x384xf32> to vector<1x128xf32>
    %128 = vector.extract_strided_slice %125 {offsets = [0, 128], sizes = [1, 128], strides = [1, 1]} : vector<1x384xf32> to vector<1x128xf32>
    %129 = vector.extract_strided_slice %125 {offsets = [0, 256], sizes = [1, 128], strides = [1, 1]} : vector<1x384xf32> to vector<1x128xf32>
    %130 = arith.mulf %128, %114 : vector<1x128xf32>
    %131 = arith.mulf %127, %126 : vector<1x128xf32>
    %132 = arith.addf %130, %131 : vector<1x128xf32>
    %133 = math.tanh %132 : vector<1x128xf32>
    %134 = arith.mulf %129, %133 : vector<1x128xf32>
    %135 = vector.extract_strided_slice %5 {offsets = [7, 0], sizes = [1, 512], strides = [1, 1]} : vector<8x512xf32> to vector<1x512xf32>
    %cst_30 = arith.constant dense<0.000000e+00> : vector<1x512xf32>
    %136 = tpu.matmul %134, %6, %cst_30 {dimension_numbers = #tpu.dot_dimension_numbers<[1], [0], [0], [1], [0, 0, 1, 1], [], []>} : vector<1x128xf32>, vector<128x512xf32>, vector<1x512xf32> -> vector<1x512xf32>
    %137 = arith.addf %135, %136 : vector<1x512xf32>
    %138 = math.tanh %137 : vector<1x512xf32>
    %139 = vector.extract_strided_slice %138 {offsets = [0, 0], sizes = [1, 384], strides = [1, 1]} : vector<1x512xf32> to vector<1x384xf32>
    %cst_31 = arith.constant 5.000000e-01 : f32
    %140 = vector.broadcast %cst_31 : f32 to vector<1x384xf32>
    %141 = arith.mulf %140, %139 : vector<1x384xf32>
    %cst_32 = arith.constant 5.000000e-01 : f32
    %142 = vector.broadcast %cst_32 : f32 to vector<1x384xf32>
    %143 = arith.addf %141, %142 : vector<1x384xf32>
    %144 = vector.extract_strided_slice %138 {offsets = [0, 384], sizes = [1, 128], strides = [1, 1]} : vector<1x512xf32> to vector<1x128xf32>
    %145 = vector.extract_strided_slice %143 {offsets = [0, 0], sizes = [1, 128], strides = [1, 1]} : vector<1x384xf32> to vector<1x128xf32>
    %146 = vector.extract_strided_slice %143 {offsets = [0, 128], sizes = [1, 128], strides = [1, 1]} : vector<1x384xf32> to vector<1x128xf32>
    %147 = vector.extract_strided_slice %143 {offsets = [0, 256], sizes = [1, 128], strides = [1, 1]} : vector<1x384xf32> to vector<1x128xf32>
    %148 = arith.mulf %146, %132 : vector<1x128xf32>
    %149 = arith.mulf %145, %144 : vector<1x128xf32>
    %150 = arith.addf %148, %149 : vector<1x128xf32>
    %151 = math.tanh %150 : vector<1x128xf32>
    %152 = arith.mulf %147, %151 : vector<1x128xf32>
    %c0_33 = arith.constant 0 : index
    %c0_34 = arith.constant 0 : index
    %153 = vector.load %arg4[%c0_33, %c0_34] : memref<128x1xf32, #tpu.memory_space<vmem>>, vector<128x1xf32>
    %cst_35 = arith.constant dense<0.000000e+00> : vector<1x1xf32>
    %154 = tpu.matmul %152, %153, %cst_35 {dimension_numbers = #tpu.dot_dimension_numbers<[1], [0], [0], [1], [0, 0, 1, 1], [], []>} : vector<1x128xf32>, vector<128x1xf32>, vector<1x1xf32> -> vector<1x1xf32>
    %c0_36 = arith.constant 0 : index
    %c0_37 = arith.constant 0 : index
    %155 = vector.load %arg5[%c0_36, %c0_37] : memref<1x1xf32, #tpu.memory_space<vmem>>, vector<1x1xf32>
    %156 = arith.addf %154, %155 : vector<1x1xf32>
    %c0_38 = arith.constant 0 : index
    %c0_39 = arith.constant 0 : index
    %157 = vector.load %arg6[%c0_38, %c0_39] : memref<1x1xf32, #tpu.memory_space<vmem>>, vector<1x1xf32>
    tpu.vector_store %arg6[%c0_38, %c0_39], %156 {strides = array<i32>} : memref<1x1xf32, #tpu.memory_space<vmem>>, vector<1x1xf32>,
    return
  }
}

</mosaic_0001>

<llo_original>
// kernel: tpu_custom_call.1
$region0: #{tpu_custom_call.1}
  #allocation0 [shape = 'u32[]', space=smem, size = 0x4, offset = 0x4, fixed_abs, tag = 'smem constant byte address 0x4 - core index']
  #allocation1 [shape = 'u32[144,128]{1,0:T(1,128)}', space=vmem, size = 0x12000, scoped, tag = 'internal scratch']
  #allocation2 [shape = 'f32[1,1]{1,0:T(1,128)S(1)}', space=vmem, size = 0x200, scoped, tag = 'scoped memory for tpu_custom_call.1']
  %s0 = inlined_call_operand.vmem [shape: f32[8,128], index: 0, kind: input, shape index: {}]
  %s1 = inlined_call_operand.hbm [shape: f32[128,512], index: 1, kind: input, shape index: {}]
  %s2 = inlined_call_operand.hbm [shape: f32[128,512], index: 2, kind: input, shape index: {}]
  %s3 = inlined_call_operand.vmem [shape: f32[1,512], index: 3, kind: input, shape index: {}]
  %s4 = inlined_call_operand.vmem [shape: f32[128,1], index: 4, kind: input, shape index: {}]
  %s5 = inlined_call_operand.<no memory space> [shape: f32[1,1], index: 5, kind: input, shape index: {}]
  %s6 = inlined_call_operand.hbm [shape: f32[1,1], index: 6, kind: output, shape index: {}]
  %s7 = sld [smem:[#allocation0]]
  $region42: #{tpu_custom_call.1} parent=0
    _
  %s9 = ssub.s32 1, %s7
  %s10 = scalar_select 0, %s9, %s7
  %v11 = vstv %s5
  %12 = vst [vmem:[#allocation2] sm:$0x1] %v11
  $region1: #{tpu_custom_call.1} parent=0
    #allocation3 [shape = 'u8[262144]{0}', space=vmem, size = 0x40000, scoped, tag = 'input window, operand 1, single buffered']
    #allocation4 [shape = 's32[1]{0}', space=sflag, size = 0x4, scoped, tag = 'scoped memory for tpu_custom_call.1']
    #allocation5 [shape = 's32[1]{0}', space=sflag, size = 0x4, scoped, tag = 'scoped memory for tpu_custom_call.1']
    #allocation6 [shape = 'u8[262144]{0}', space=vmem, size = 0x40000, scoped, tag = 'input window, operand 2, single buffered']
    #allocation7 [shape = 's32[1]{0}', space=sflag, size = 0x4, scoped, tag = 'scoped memory for tpu_custom_call.1']
    #allocation8 [shape = 'u8[512]{0}', space=vmem, size = 0x400, scoped, tag = 'output window, operand 0, single buffered']
    %13 = vsyncpa [#allocation4], 0
    %14 = vsyncpa [#allocation7], 0
    %15 = vsyncpa [#allocation5], 0
    // Predicated region
    $region2: #{tpu_custom_call.1} parent=1 // pred_check
      _
    $region3: #{tpu_custom_call.1} parent=1 // pred_check_branch
      %17 = sbr.rel (0) target = $region5
    $region4: #{tpu_custom_call.1} parent=1 // pred_region
      _
    $region5: #{tpu_custom_call.1} parent=1 // pred_fallthru
      _
    // Predicated region
    $region6: #{tpu_custom_call.1} parent=1 // pred_check
      _
    $region7: #{tpu_custom_call.1} parent=1 // pred_check_branch
      %19 = sbr.rel (0) target = $region9
    $region8: #{tpu_custom_call.1} parent=1 // pred_region
      %s21 = ssub.s32 8192, 8192
      %22 = vsyncadd [#allocation4], %s21
      %s23 = sshll.u32 [#allocation3], 4
      %s24 = int_to_ptr.vmem [resolvable:$true] %s23
      %29 = dma.hbm_to_vmem [thread:$0]  %s1, 8192, %s24, [#allocation4], 512, 512, 32
    $region9: #{tpu_custom_call.1} parent=1 // pred_fallthru
      _
    // Predicated region
    $region10: #{tpu_custom_call.1} parent=1 // pred_check
      _
    $region11: #{tpu_custom_call.1} parent=1 // pred_check_branch
      %31 = sbr.rel (0) target = $region13
    $region12: #{tpu_custom_call.1} parent=1 // pred_region
      %s33 = ssub.s32 8192, 8192
      %34 = vsyncadd [#allocation7], %s33
      %s35 = sshll.u32 [#allocation6], 4
      %s36 = int_to_ptr.vmem [resolvable:$true] %s35
      %41 = dma.hbm_to_vmem [thread:$0]  %s2, 8192, %s36, [#allocation7], 512, 512, 32
    $region13: #{tpu_custom_call.1} parent=1 // pred_fallthru
      _
    // Predicated region
    $region14: #{tpu_custom_call.1} parent=1 // pred_check
      _
    $region15: #{tpu_custom_call.1} parent=1 // pred_check_branch
      %43 = sbr.rel (0) target = $region17
    $region16: #{tpu_custom_call.1} parent=1 // pred_region
      _
    $region17: #{tpu_custom_call.1} parent=1 // pred_fallthru
      _
    // Predicated region
    $region18: #{tpu_custom_call.1} parent=1 // pred_check
      _
    $region19: #{tpu_custom_call.1} parent=1 // pred_check_branch
      %45 = sbr.rel (0) target = $region21
    $region20: #{tpu_custom_call.1} parent=1 // pred_region
      _
    $region21: #{tpu_custom_call.1} parent=1 // pred_fallthru
      _
    // Predicated region
    $region22: #{tpu_custom_call.1} parent=1 // pred_check
      _
    $region23: #{tpu_custom_call.1} parent=1 // pred_check_branch
      %47 = sbr.rel (0) target = $region25
    $region24: #{tpu_custom_call.1} parent=1 // pred_region
      _
    $region25: #{tpu_custom_call.1} parent=1 // pred_fallthru
      _
    // Predicated region
    $region26: #{tpu_custom_call.1} parent=1 // pred_check
      _
    $region27: #{tpu_custom_call.1} parent=1 // pred_check_branch
      %49 = sbr.rel (0) target = $region29
    $region28: #{tpu_custom_call.1} parent=1 // pred_region
      %50 = dma.done [#allocation4], 8192
    $region29: #{tpu_custom_call.1} parent=1 // pred_fallthru
      _
    // Predicated region
    $region30: #{tpu_custom_call.1} parent=1 // pred_check
      _
    $region31: #{tpu_custom_call.1} parent=1 // pred_check_branch
      %52 = sbr.rel (0) target = $region33
    $region32: #{tpu_custom_call.1} parent=1 // pred_region
      %53 = dma.done [#allocation7], 8192
    $region33: #{tpu_custom_call.1} parent=1 // pred_fallthru
      _
    %v54 = vld [vmem:[%s0] sm:$0xff]
    %v55 = vld [vmem:[#allocation3] sm:$0xff]
    %v56 = vld [vmem:[#allocation3 + $0x8] sm:$0xff]
    %v57 = vld [vmem:[#allocation3 + $0x10] sm:$0xff]
    %v58 = vld [vmem:[#allocation3 + $0x18] sm:$0xff]
    %v59 = vld [vmem:[#allocation3 + $0x20] sm:$0xff]
    %v60 = vld [vmem:[#allocation3 + $0x28] sm:$0xff]
    %v61 = vld [vmem:[#allocation3 + $0x30] sm:$0xff]
    %v62 = vld [vmem:[#allocation3 + $0x38] sm:$0xff]
    %v63 = vld [vmem:[#allocation3 + $0x40] sm:$0xff]
    %v64 = vld [vmem:[#allocation3 + $0x48] sm:$0xff]
    %v65 = vld [vmem:[#allocation3 + $0x50] sm:$0xff]
    %v66 = vld [vmem:[#allocation3 + $0x58] sm:$0xff]
    %v67 = vld [vmem:[#allocation3 + $0x60] sm:$0xff]
    %v68 = vld [vmem:[#allocation3 + $0x68] sm:$0xff]
    %v69 = vld [vmem:[#allocation3 + $0x70] sm:$0xff]
    %v70 = vld [vmem:[#allocation3 + $0x78] sm:$0xff]
    %v71 = vld [vmem:[#allocation3 + $0x80] sm:$0xff]
    %v72 = vld [vmem:[#allocation3 + $0x88] sm:$0xff]
    %v73 = vld [vmem:[#allocation3 + $0x90] sm:$0xff]
    %v74 = vld [vmem:[#allocation3 + $0x98] sm:$0xff]
    %v75 = vld [vmem:[#allocation3 + $0xa0] sm:$0xff]
    %v76 = vld [vmem:[#allocation3 + $0xa8] sm:$0xff]
    %v77 = vld [vmem:[#allocation3 + $0xb0] sm:$0xff]
    %v78 = vld [vmem:[#allocation3 + $0xb8] sm:$0xff]
    %v79 = vld [vmem:[#allocation3 + $0xc0] sm:$0xff]
    %v80 = vld [vmem:[#allocation3 + $0xc8] sm:$0xff]
    %v81 = vld [vmem:[#allocation3 + $0xd0] sm:$0xff]
    %v82 = vld [vmem:[#allocation3 + $0xd8] sm:$0xff]
    %v83 = vld [vmem:[#allocation3 + $0xe0] sm:$0xff]
    %v84 = vld [vmem:[#allocation3 + $0xe8] sm:$0xff]
    %v85 = vld [vmem:[#allocation3 + $0xf0] sm:$0xff]
    %v86 = vld [vmem:[#allocation3 + $0xf8] sm:$0xff]
    %v87 = vld [vmem:[#allocation3 + $0x100] sm:$0xff]
    %v88 = vld [vmem:[#allocation3 + $0x108] sm:$0xff]
    %v89 = vld [vmem:[#allocation3 + $0x110] sm:$0xff]
    %v90 = vld [vmem:[#allocation3 + $0x118] sm:$0xff]
    %v91 = vld [vmem:[#allocation3 + $0x120] sm:$0xff]
    %v92 = vld [vmem:[#allocation3 + $0x128] sm:$0xff]
    %v93 = vld [vmem:[#allocation3 + $0x130] sm:$0xff]
    %v94 = vld [vmem:[#allocation3 + $0x138] sm:$0xff]
    %v95 = vld [vmem:[#allocation3 + $0x140] sm:$0xff]
    %v96 = vld [vmem:[#allocation3 + $0x148] sm:$0xff]
    %v97 = vld [vmem:[#allocation3 + $0x150] sm:$0xff]
    %v98 = vld [vmem:[#allocation3 + $0x158] sm:$0xff]
    %v99 = vld [vmem:[#allocation3 + $0x160] sm:$0xff]
    %v100 = vld [vmem:[#allocation3 + $0x168] sm:$0xff]
    %v101 = vld [vmem:[#allocation3 + $0x170] sm:$0xff]
    %v102 = vld [vmem:[#allocation3 + $0x178] sm:$0xff]
    %v103 = vld [vmem:[#allocation3 + $0x180] sm:$0xff]
    %v104 = vld [vmem:[#allocation3 + $0x188] sm:$0xff]
    %v105 = vld [vmem:[#allocation3 + $0x190] sm:$0xff]
    %v106 = vld [vmem:[#allocation3 + $0x198] sm:$0xff]
    %v107 = vld [vmem:[#allocation3 + $0x1a0] sm:$0xff]
    %v108 = vld [vmem:[#allocation3 + $0x1a8] sm:$0xff]
    %v109 = vld [vmem:[#allocation3 + $0x1b0] sm:$0xff]
    %v110 = vld [vmem:[#allocation3 + $0x1b8] sm:$0xff]
    %v111 = vld [vmem:[#allocation3 + $0x1c0] sm:$0xff]
    %v112 = vld [vmem:[#allocation3 + $0x1c8] sm:$0xff]
    %v113 = vld [vmem:[#allocation3 + $0x1d0] sm:$0xff]
    %v114 = vld [vmem:[#allocation3 + $0x1d8] sm:$0xff]
    %v115 = vld [vmem:[#allocation3 + $0x1e0] sm:$0xff]
    %v116 = vld [vmem:[#allocation3 + $0x1e8] sm:$0xff]
    %v117 = vld [vmem:[#allocation3 + $0x1f0] sm:$0xff]
    %v118 = vld [vmem:[#allocation3 + $0x1f8] sm:$0xff]
    %v119 = vld [vmem:[%s3] sm:$0xf]
    %v121 = vlaneseq
    %v122 = vshrl.u32 %v121, 7
    %v123 = vsub.s32 0, %v122
    %v124 = vrot.slane %v119, %v123
    %v125 = vlaneseq
    %v126 = vshrl.u32 %v125, 7
    %v127 = vsub.s32 1, %v126
    %v128 = vrot.slane %v119, %v127
    %v129 = vlaneseq
    %v130 = vshrl.u32 %v129, 7
    %v131 = vsub.s32 2, %v130
    %v132 = vrot.slane %v119, %v131
    %v133 = vlaneseq
    %v134 = vshrl.u32 %v133, 7
    %v135 = vsub.s32 3, %v134
    %v136 = vrot.slane %v119, %v135
    %141 = vmatprep.subr.mxu0 %v56
    %142 = vmatpush1.msra.mxu0 %v55
    %143 = vmatprep.subr.mxu0 %v60
    %144 = vmatpush1.msra.mxu0 %v59
    %145 = vmatprep.subr.mxu0 %v64
    %146 = vmatpush1.msra.mxu0 %v63
    %147 = vmatprep.subr.mxu0 %v68
    %148 = vmatpush1.msra.mxu0 %v67
    %149 = vmatprep.subr.mxu0 %v72
    %150 = vmatpush1.msra.mxu0 %v71
    %151 = vmatprep.subr.mxu0 %v76
    %152 = vmatpush1.msra.mxu0 %v75
    %153 = vmatprep.subr.mxu0 %v80
    %154 = vmatpush1.msra.mxu0 %v79
    %155 = vmatprep.subr.mxu0 %v84
    %156 = vmatpush1.msra.mxu0 %v83
    %157 = vmatprep.subr.mxu0 %v88
    %158 = vmatpush1.msra.mxu0 %v87
    %159 = vmatprep.subr.mxu0 %v92
    %160 = vmatpush1.msra.mxu0 %v91
    %161 = vmatprep.subr.mxu0 %v96
    %162 = vmatpush1.msra.mxu0 %v95
    %163 = vmatprep.subr.mxu0 %v100
    %164 = vmatpush1.msra.mxu0 %v99
    %165 = vmatprep.subr.mxu0 %v104
    %166 = vmatpush1.msra.mxu0 %v103
    %167 = vmatprep.subr.mxu0 %v108
    %168 = vmatpush1.msra.mxu0 %v107
    %169 = vmatprep.subr.mxu0 %v112
    %170 = vmatpush1.msra.mxu0 %v111
    %171 = vmatprep.subr.mxu0 %v116
    %172 = vmatpush1.msra.mxu0 %v115
    %173 = vmatprep.subr.mxu0 0.0
    %174 = vmatpush1.msra.mxu0 0.0
    %175 = vmatprep.subr.mxu0 0.0
    %176 = vmatpush1.msra.mxu0 0.0
    %177 = vmatprep.subr.mxu0 0.0
    %178 = vmatpush1.msra.mxu0 0.0
    %179 = vmatprep.subr.mxu0 0.0
    %180 = vmatpush1.msra.mxu0 0.0
    %181 = vmatprep.subr.mxu0 0.0
    %182 = vmatpush1.msra.mxu0 0.0
    %183 = vmatprep.subr.mxu0 0.0
    %184 = vmatpush1.msra.mxu0 0.0
    %185 = vmatprep.subr.mxu0 0.0
    %186 = vmatpush1.msra.mxu0 0.0
    %187 = vmatprep.subr.mxu0 0.0
    %188 = vmatpush1.msra.mxu0 0.0
    %189 = vmatprep.subr.mxu0 0.0
    %190 = vmatpush1.msra.mxu0 0.0
    %191 = vmatprep.subr.mxu0 0.0
    %192 = vmatpush1.msra.mxu0 0.0
    %193 = vmatprep.subr.mxu0 0.0
    %194 = vmatpush1.msra.mxu0 0.0
    %195 = vmatprep.subr.mxu0 0.0
    %196 = vmatpush1.msra.mxu0 0.0
    %197 = vmatprep.subr.mxu0 0.0
    %198 = vmatpush1.msra.mxu0 0.0
    %199 = vmatprep.subr.mxu0 0.0
    %200 = vmatpush1.msra.mxu0 0.0
    %201 = vmatprep.subr.mxu0 0.0
    %202 = vmatpush1.msra.mxu0 0.0
    %203 = vmatprep.subr.mxu0 0.0
    %204 = vmatpush1.msra.mxu0 0.0
    %205 = vmatprep.mubr.f32.mxu0 0.0
    %206 = vmatmul.mubr.f32.gmra.mrb[0].mxu0 %v54
    %v207 = vpop.f32.mrb[0].mxu0
    %v208 = vadd.f32 %v124, %v207
    %v209 = vpop.f32.mrb[0].mxu0
    %v210 = vadd.f32 %v128, %v209
    %211 = vdwg.mxu0
    %212 = vmatprep.subr.mxu0 %v58
    %213 = vmatpush1.msra.mxu0 %v57
    %214 = vmatprep.subr.mxu0 %v62
    %215 = vmatpush1.msra.mxu0 %v61
    %216 = vmatprep.subr.mxu0 %v66
    %217 = vmatpush1.msra.mxu0 %v65
    %218 = vmatprep.subr.mxu0 %v70
    %219 = vmatpush1.msra.mxu0 %v69
    %220 = vmatprep.subr.mxu0 %v74
    %221 = vmatpush1.msra.mxu0 %v73
    %222 = vmatprep.subr.mxu0 %v78
    %223 = vmatpush1.msra.mxu0 %v77
    %224 = vmatprep.subr.mxu0 %v82
    %225 = vmatpush1.msra.mxu0 %v81
    %226 = vmatprep.subr.mxu0 %v86
    %227 = vmatpush1.msra.mxu0 %v85
    %228 = vmatprep.subr.mxu0 %v90
    %229 = vmatpush1.msra.mxu0 %v89
    %230 = vmatprep.subr.mxu0 %v94
    %231 = vmatpush1.msra.mxu0 %v93
    %232 = vmatprep.subr.mxu0 %v98
    %233 = vmatpush1.msra.mxu0 %v97
    %234 = vmatprep.subr.mxu0 %v102
    %235 = vmatpush1.msra.mxu0 %v101
    %236 = vmatprep.subr.mxu0 %v106
    %237 = vmatpush1.msra.mxu0 %v105
    %238 = vmatprep.subr.mxu0 %v110
    %239 = vmatpush1.msra.mxu0 %v109
    %240 = vmatprep.subr.mxu0 %v114
    %241 = vmatpush1.msra.mxu0 %v113
    %242 = vmatprep.subr.mxu0 %v118
    %243 = vmatpush1.msra.mxu0 %v117
    %244 = vmatprep.subr.mxu0 0.0
    %245 = vmatpush1.msra.mxu0 0.0
    %246 = vmatprep.subr.mxu0 0.0
    %247 = vmatpush1.msra.mxu0 0.0
    %248 = vmatprep.subr.mxu0 0.0
    %249 = vmatpush1.msra.mxu0 0.0
    %250 = vmatprep.subr.mxu0 0.0
    %251 = vmatpush1.msra.mxu0 0.0
    %252 = vmatprep.subr.mxu0 0.0
    %253 = vmatpush1.msra.mxu0 0.0
    %254 = vmatprep.subr.mxu0 0.0
    %255 = vmatpush1.msra.mxu0 0.0
    %256 = vmatprep.subr.mxu0 0.0
    %257 = vmatpush1.msra.mxu0 0.0
    %258 = vmatprep.subr.mxu0 0.0
    %259 = vmatpush1.msra.mxu0 0.0
    %260 = vmatprep.subr.mxu0 0.0
    %261 = vmatpush1.msra.mxu0 0.0
    %262 = vmatprep.subr.mxu0 0.0
    %263 = vmatpush1.msra.mxu0 0.0
    %264 = vmatprep.subr.mxu0 0.0
    %265 = vmatpush1.msra.mxu0 0.0
    %266 = vmatprep.subr.mxu0 0.0
    %267 = vmatpush1.msra.mxu0 0.0
    %268 = vmatprep.subr.mxu0 0.0
    %269 = vmatpush1.msra.mxu0 0.0
    %270 = vmatprep.subr.mxu0 0.0
    %271 = vmatpush1.msra.mxu0 0.0
    %272 = vmatprep.subr.mxu0 0.0
    %273 = vmatpush1.msra.mxu0 0.0
    %274 = vmatprep.subr.mxu0 0.0
    %275 = vmatpush1.msra.mxu0 0.0
    %276 = vmatprep.mubr.f32.mxu0 0.0
    %277 = vmatmul.mubr.f32.gmra.mrb[0].mxu0 %v54
    %v278 = vpop.f32.mrb[0].mxu0
    %v279 = vadd.f32 %v132, %v278
    %v280 = vpop.f32.mrb[0].mxu0
    %v281 = vadd.f32 %v136, %v280
    %282 = vdwg.mxu0
    %v283 = vld [vmem:[#allocation6] sm:$0xff]
    %v284 = vld [vmem:[#allocation6 + $0x8] sm:$0xff]
    %v285 = vld [vmem:[#allocation6 + $0x10] sm:$0xff]
    %v286 = vld [vmem:[#allocation6 + $0x18] sm:$0xff]
    %v287 = vld [vmem:[#allocation6 + $0x20] sm:$0xff]
    %v288 = vld [vmem:[#allocation6 + $0x28] sm:$0xff]
    %v289 = vld [vmem:[#allocation6 + $0x30] sm:$0xff]
    %v290 = vld [vmem:[#allocation6 + $0x38] sm:$0xff]
    %v291 = vld [vmem:[#allocation6 + $0x40] sm:$0xff]
    %v292 = vld [vmem:[#allocation6 + $0x48] sm:$0xff]
    %v293 = vld [vmem:[#allocation6 + $0x50] sm:$0xff]
    %v294 = vld [vmem:[#allocation6 + $0x58] sm:$0xff]
    %v295 = vld [vmem:[#allocation6 + $0x60] sm:$0xff]
    %v296 = vld [vmem:[#allocation6 + $0x68] sm:$0xff]
    %v297 = vld [vmem:[#allocation6 + $0x70] sm:$0xff]
    %v298 = vld [vmem:[#allocation6 + $0x78] sm:$0xff]
    %v299 = vld [vmem:[#allocation6 + $0x80] sm:$0xff]
    %v300 = vld [vmem:[#allocation6 + $0x88] sm:$0xff]
    %v301 = vld [vmem:[#allocation6 + $0x90] sm:$0xff]
    %v302 = vld [vmem:[#allocation6 + $0x98] sm:$0xff]
    %v303 = vld [vmem:[#allocation6 + $0xa0] sm:$0xff]
    %v304 = vld [vmem:[#allocation6 + $0xa8] sm:$0xff]
    %v305 = vld [vmem:[#allocation6 + $0xb0] sm:$0xff]
    %v306 = vld [vmem:[#allocation6 + $0xb8] sm:$0xff]
    %v307 = vld [vmem:[#allocation6 + $0xc0] sm:$0xff]
    %v308 = vld [vmem:[#allocation6 + $0xc8] sm:$0xff]
    %v309 = vld [vmem:[#allocation6 + $0xd0] sm:$0xff]
    %v310 = vld [vmem:[#allocation6 + $0xd8] sm:$0xff]
    %v311 = vld [vmem:[#allocation6 + $0xe0] sm:$0xff]
    %v312 = vld [vmem:[#allocation6 + $0xe8] sm:$0xff]
    %v313 = vld [vmem:[#allocation6 + $0xf0] sm:$0xff]
    %v314 = vld [vmem:[#allocation6 + $0xf8] sm:$0xff]
    %v315 = vld [vmem:[#allocation6 + $0x100] sm:$0xff]
    %v316 = vld [vmem:[#allocation6 + $0x108] sm:$0xff]
    %v317 = vld [vmem:[#allocation6 + $0x110] sm:$0xff]
    %v318 = vld [vmem:[#allocation6 + $0x118] sm:$0xff]
    %v319 = vld [vmem:[#allocation6 + $0x120] sm:$0xff]
    %v320 = vld [vmem:[#allocation6 + $0x128] sm:$0xff]
    %v321 = vld [vmem:[#allocation6 + $0x130] sm:$0xff]
    %v322 = vld [vmem:[#allocation6 + $0x138] sm:$0xff]
    %v323 = vld [vmem:[#allocation6 + $0x140] sm:$0xff]
    %v324 = vld [vmem:[#allocation6 + $0x148] sm:$0xff]
    %v325 = vld [vmem:[#allocation6 + $0x150] sm:$0xff]
    %v326 = vld [vmem:[#allocation6 + $0x158] sm:$0xff]
    %v327 = vld [vmem:[#allocation6 + $0x160] sm:$0xff]
    %v328 = vld [vmem:[#allocation6 + $0x168] sm:$0xff]
    %v329 = vld [vmem:[#allocation6 + $0x170] sm:$0xff]
    %v330 = vld [vmem:[#allocation6 + $0x178] sm:$0xff]
    %v331 = vld [vmem:[#allocation6 + $0x180] sm:$0xff]
    %v332 = vld [vmem:[#allocation6 + $0x188] sm:$0xff]
    %v333 = vld [vmem:[#allocation6 + $0x190] sm:$0xff]
    %v334 = vld [vmem:[#allocation6 + $0x198] sm:$0xff]
    %v335 = vld [vmem:[#allocation6 + $0x1a0] sm:$0xff]
    %v336 = vld [vmem:[#allocation6 + $0x1a8] sm:$0xff]
    %v337 = vld [vmem:[#allocation6 + $0x1b0] sm:$0xff]
    %v338 = vld [vmem:[#allocation6 + $0x1b8] sm:$0xff]
    %v339 = vld [vmem:[#allocation6 + $0x1c0] sm:$0xff]
    %v340 = vld [vmem:[#allocation6 + $0x1c8] sm:$0xff]
    %v341 = vld [vmem:[#allocation6 + $0x1d0] sm:$0xff]
    %v342 = vld [vmem:[#allocation6 + $0x1d8] sm:$0xff]
    %v343 = vld [vmem:[#allocation6 + $0x1e0] sm:$0xff]
    %v344 = vld [vmem:[#allocation6 + $0x1e8] sm:$0xff]
    %v345 = vld [vmem:[#allocation6 + $0x1f0] sm:$0xff]
    %v346 = vld [vmem:[#allocation6 + $0x1f8] sm:$0xff]
    %347 = vmatprep.subr.mxu0 %v284
    %348 = vmatpush1.msra.mxu0 %v283
    %349 = vmatprep.subr.mxu0 %v288
    %350 = vmatpush1.msra.mxu0 %v287
    %351 = vmatprep.subr.mxu0 %v292
    %352 = vmatpush1.msra.mxu0 %v291
    %353 = vmatprep.subr.mxu0 %v296
    %354 = vmatpush1.msra.mxu0 %v295
    %355 = vmatprep.subr.mxu0 %v300
    %356 = vmatpush1.msra.mxu0 %v299
    %357 = vmatprep.subr.mxu0 %v304
    %358 = vmatpush1.msra.mxu0 %v303
    %359 = vmatprep.subr.mxu0 %v308
    %360 = vmatpush1.msra.mxu0 %v307
    %361 = vmatprep.subr.mxu0 %v312
    %362 = vmatpush1.msra.mxu0 %v311
    %363 = vmatprep.subr.mxu0 %v316
    %364 = vmatpush1.msra.mxu0 %v315
    %365 = vmatprep.subr.mxu0 %v320
    %366 = vmatpush1.msra.mxu0 %v319
    %367 = vmatprep.subr.mxu0 %v324
    %368 = vmatpush1.msra.mxu0 %v323
    %369 = vmatprep.subr.mxu0 %v328
    %370 = vmatpush1.msra.mxu0 %v327
    %371 = vmatprep.subr.mxu0 %v332
    %372 = vmatpush1.msra.mxu0 %v331
    %373 = vmatprep.subr.mxu0 %v336
    %374 = vmatpush1.msra.mxu0 %v335
    %375 = vmatprep.subr.mxu0 %v340
    %376 = vmatpush1.msra.mxu0 %v339
    %377 = vmatprep.subr.mxu0 %v344
    %378 = vmatpush1.msra.mxu0 %v343
    %379 = vmatprep.subr.mxu0 0.0
    %380 = vmatpush1.msra.mxu0 0.0
    %381 = vmatprep.subr.mxu0 0.0
    %382 = vmatpush1.msra.mxu0 0.0
    %383 = vmatprep.subr.mxu0 0.0
    %384 = vmatpush1.msra.mxu0 0.0
    %385 = vmatprep.subr.mxu0 0.0
    %386 = vmatpush1.msra.mxu0 0.0
    %387 = vmatprep.subr.mxu0 0.0
    %388 = vmatpush1.msra.mxu0 0.0
    %389 = vmatprep.subr.mxu0 0.0
    %390 = vmatpush1.msra.mxu0 0.0
    %391 = vmatprep.subr.mxu0 0.0
    %392 = vmatpush1.msra.mxu0 0.0
    %393 = vmatprep.subr.mxu0 0.0
    %394 = vmatpush1.msra.mxu0 0.0
    %395 = vmatprep.subr.mxu0 0.0
    %396 = vmatpush1.msra.mxu0 0.0
    %397 = vmatprep.subr.mxu0 0.0
    %398 = vmatpush1.msra.mxu0 0.0
    %399 = vmatprep.subr.mxu0 0.0
    %400 = vmatpush1.msra.mxu0 0.0
    %401 = vmatprep.subr.mxu0 0.0
    %402 = vmatpush1.msra.mxu0 0.0
    %403 = vmatprep.subr.mxu0 0.0
    %404 = vmatpush1.msra.mxu0 0.0
    %405 = vmatprep.subr.mxu0 0.0
    %406 = vmatpush1.msra.mxu0 0.0
    %407 = vmatprep.subr.mxu0 0.0
    %408 = vmatpush1.msra.mxu0 0.0
    %409 = vmatprep.subr.mxu0 0.0
    %410 = vmatpush1.msra.mxu0 0.0
    %411 = vmatprep.mubr.f32.mxu0 0.0
    %412 = vmatmul.mubr.f32.gmra.mrb[0].mxu0 0.0
    %v413 = vpop.f32.mrb[0].mxu0
    %v414 = vadd.f32 0.0, %v413
    %v415 = vpop.f32.mrb[0].mxu0
    %v416 = vadd.f32 0.0, %v415
    %417 = vdwg.mxu0
    %418 = vmatprep.subr.mxu0 %v286
    %419 = vmatpush1.msra.mxu0 %v285
    %420 = vmatprep.subr.mxu0 %v290
    %421 = vmatpush1.msra.mxu0 %v289
    %422 = vmatprep.subr.mxu0 %v294
    %423 = vmatpush1.msra.mxu0 %v293
    %424 = vmatprep.subr.mxu0 %v298
    %425 = vmatpush1.msra.mxu0 %v297
    %426 = vmatprep.subr.mxu0 %v302
    %427 = vmatpush1.msra.mxu0 %v301
    %428 = vmatprep.subr.mxu0 %v306
    %429 = vmatpush1.msra.mxu0 %v305
    %430 = vmatprep.subr.mxu0 %v310
    %431 = vmatpush1.msra.mxu0 %v309
    %432 = vmatprep.subr.mxu0 %v314
    %433 = vmatpush1.msra.mxu0 %v313
    %434 = vmatprep.subr.mxu0 %v318
    %435 = vmatpush1.msra.mxu0 %v317
    %436 = vmatprep.subr.mxu0 %v322
    %437 = vmatpush1.msra.mxu0 %v321
    %438 = vmatprep.subr.mxu0 %v326
    %439 = vmatpush1.msra.mxu0 %v325
    %440 = vmatprep.subr.mxu0 %v330
    %441 = vmatpush1.msra.mxu0 %v329
    %442 = vmatprep.subr.mxu0 %v334
    %443 = vmatpush1.msra.mxu0 %v333
    %444 = vmatprep.subr.mxu0 %v338
    %445 = vmatpush1.msra.mxu0 %v337
    %446 = vmatprep.subr.mxu0 %v342
    %447 = vmatpush1.msra.mxu0 %v341
    %448 = vmatprep.subr.mxu0 %v346
    %449 = vmatpush1.msra.mxu0 %v345
    %450 = vmatprep.subr.mxu0 0.0
    %451 = vmatpush1.msra.mxu0 0.0
    %452 = vmatprep.subr.mxu0 0.0
    %453 = vmatpush1.msra.mxu0 0.0
    %454 = vmatprep.subr.mxu0 0.0
    %455 = vmatpush1.msra.mxu0 0.0
    %456 = vmatprep.subr.mxu0 0.0
    %457 = vmatpush1.msra.mxu0 0.0
    %458 = vmatprep.subr.mxu0 0.0
    %459 = vmatpush1.msra.mxu0 0.0
    %460 = vmatprep.subr.mxu0 0.0
    %461 = vmatpush1.msra.mxu0 0.0
    %462 = vmatprep.subr.mxu0 0.0
    %463 = vmatpush1.msra.mxu0 0.0
    %464 = vmatprep.subr.mxu0 0.0
    %465 = vmatpush1.msra.mxu0 0.0
    %466 = vmatprep.subr.mxu0 0.0
    %467 = vmatpush1.msra.mxu0 0.0
    %468 = vmatprep.subr.mxu0 0.0
    %469 = vmatpush1.msra.mxu0 0.0
    %470 = vmatprep.subr.mxu0 0.0
    %471 = vmatpush1.msra.mxu0 0.0
    %472 = vmatprep.subr.mxu0 0.0
    %473 = vmatpush1.msra.mxu0 0.0
    %474 = vmatprep.subr.mxu0 0.0
    %475 = vmatpush1.msra.mxu0 0.0
    %476 = vmatprep.subr.mxu0 0.0
    %477 = vmatpush1.msra.mxu0 0.0
    %478 = vmatprep.subr.mxu0 0.0
    %479 = vmatpush1.msra.mxu0 0.0
    %480 = vmatprep.subr.mxu0 0.0
    %481 = vmatpush1.msra.mxu0 0.0
    %482 = vmatprep.mubr.f32.mxu0 0.0
    %483 = vmatmul.mubr.f32.gmra.mrb[0].mxu0 0.0
    %v484 = vpop.f32.mrb[0].mxu0
    %v485 = vadd.f32 0.0, %v484
    %v486 = vpop.f32.mrb[0].mxu0
    %v487 = vadd.f32 0.0, %v486
    %488 = vdwg.mxu0
    %v489 = vadd.f32 %v208, %v414
    %v490 = vadd.f32 %v210, %v416
    %v491 = vadd.f32 %v279, %v485
    %v492 = vadd.f32 %v281, %v487
    %v493 = vtanh.pop %v489
    %v494 = vtanh.pop %v490
    %v495 = vtanh.pop %v491
    %v496 = vtanh.pop %v492
    %v497 = vmul.f32 %v493, 0.5
    %v498 = vmul.f32 %v494, 0.5
    %v499 = vmul.f32 %v495, 0.5
    %v500 = vadd.f32 %v497, 0.5
    %v501 = vadd.f32 %v498, 0.5
    %v502 = vadd.f32 %v499, 0.5
    %v503 = vmul.f32 %v501, 0.0
    %v504 = vmul.f32 %v500, %v496
    %v505 = vadd.f32 %v503, %v504
    %v506 = vtanh.pop %v505
    %v507 = vmul.f32 %v502, %v506
    %508 = vmatprep.subr.mxu0 %v284
    %509 = vmatpush1.msra.mxu0 %v283
    %510 = vmatprep.subr.mxu0 %v288
    %511 = vmatpush1.msra.mxu0 %v287
    %512 = vmatprep.subr.mxu0 %v292
    %513 = vmatpush1.msra.mxu0 %v291
    %514 = vmatprep.subr.mxu0 %v296
    %515 = vmatpush1.msra.mxu0 %v295
    %516 = vmatprep.subr.mxu0 %v300
    %517 = vmatpush1.msra.mxu0 %v299
    %518 = vmatprep.subr.mxu0 %v304
    %519 = vmatpush1.msra.mxu0 %v303
    %520 = vmatprep.subr.mxu0 %v308
    %521 = vmatpush1.msra.mxu0 %v307
    %522 = vmatprep.subr.mxu0 %v312
    %523 = vmatpush1.msra.mxu0 %v311
    %524 = vmatprep.subr.mxu0 %v316
    %525 = vmatpush1.msra.mxu0 %v315
    %526 = vmatprep.subr.mxu0 %v320
    %527 = vmatpush1.msra.mxu0 %v319
    %528 = vmatprep.subr.mxu0 %v324
    %529 = vmatpush1.msra.mxu0 %v323
    %530 = vmatprep.subr.mxu0 %v328
    %531 = vmatpush1.msra.mxu0 %v327
    %532 = vmatprep.subr.mxu0 %v332
    %533 = vmatpush1.msra.mxu0 %v331
    %534 = vmatprep.subr.mxu0 %v336
    %535 = vmatpush1.msra.mxu0 %v335
    %536 = vmatprep.subr.mxu0 %v340
    %537 = vmatpush1.msra.mxu0 %v339
    %538 = vmatprep.subr.mxu0 %v344
    %539 = vmatpush1.msra.mxu0 %v343
    %540 = vmatprep.subr.mxu0 0.0
    %541 = vmatpush1.msra.mxu0 0.0
    %542 = vmatprep.subr.mxu0 0.0
    %543 = vmatpush1.msra.mxu0 0.0
    %544 = vmatprep.subr.mxu0 0.0
    %545 = vmatpush1.msra.mxu0 0.0
    %546 = vmatprep.subr.mxu0 0.0
    %547 = vmatpush1.msra.mxu0 0.0
    %548 = vmatprep.subr.mxu0 0.0
    %549 = vmatpush1.msra.mxu0 0.0
    %550 = vmatprep.subr.mxu0 0.0
    %551 = vmatpush1.msra.mxu0 0.0
    %552 = vmatprep.subr.mxu0 0.0
    %553 = vmatpush1.msra.mxu0 0.0
    %554 = vmatprep.subr.mxu0 0.0
    %555 = vmatpush1.msra.mxu0 0.0
    %556 = vmatprep.subr.mxu0 0.0
    %557 = vmatpush1.msra.mxu0 0.0
    %558 = vmatprep.subr.mxu0 0.0
    %559 = vmatpush1.msra.mxu0 0.0
    %560 = vmatprep.subr.mxu0 0.0
    %561 = vmatpush1.msra.mxu0 0.0
    %562 = vmatprep.subr.mxu0 0.0
    %563 = vmatpush1.msra.mxu0 0.0
    %564 = vmatprep.subr.mxu0 0.0
    %565 = vmatpush1.msra.mxu0 0.0
    %566 = vmatprep.subr.mxu0 0.0
    %567 = vmatpush1.msra.mxu0 0.0
    %568 = vmatprep.subr.mxu0 0.0
    %569 = vmatpush1.msra.mxu0 0.0
    %570 = vmatprep.subr.mxu0 0.0
    %571 = vmatpush1.msra.mxu0 0.0
    %572 = vmatprep.mubr.f32.mxu0 0.0
    %573 = vmatmul.mubr.f32.gmra.mrb[0].mxu0 %v507
    %v574 = vpop.f32.mrb[0].mxu0
    %v575 = vadd.f32 0.0, %v574
    %v576 = vpop.f32.mrb[0].mxu0
    %v577 = vadd.f32 0.0, %v576
    %578 = vdwg.mxu0
    %579 = vmatprep.subr.mxu0 %v286
    %580 = vmatpush1.msra.mxu0 %v285
    %581 = vmatprep.subr.mxu0 %v290
    %582 = vmatpush1.msra.mxu0 %v289
    %583 = vmatprep.subr.mxu0 %v294
    %584 = vmatpush1.msra.mxu0 %v293
    %585 = vmatprep.subr.mxu0 %v298
    %586 = vmatpush1.msra.mxu0 %v297
    %587 = vmatprep.subr.mxu0 %v302
    %588 = vmatpush1.msra.mxu0 %v301
    %589 = vmatprep.subr.mxu0 %v306
    %590 = vmatpush1.msra.mxu0 %v305
    %591 = vmatprep.subr.mxu0 %v310
    %592 = vmatpush1.msra.mxu0 %v309
    %593 = vmatprep.subr.mxu0 %v314
    %594 = vmatpush1.msra.mxu0 %v313
    %595 = vmatprep.subr.mxu0 %v318
    %596 = vmatpush1.msra.mxu0 %v317
    %597 = vmatprep.subr.mxu0 %v322
    %598 = vmatpush1.msra.mxu0 %v321
    %599 = vmatprep.subr.mxu0 %v326
    %600 = vmatpush1.msra.mxu0 %v325
    %601 = vmatprep.subr.mxu0 %v330
    %602 = vmatpush1.msra.mxu0 %v329
    %603 = vmatprep.subr.mxu0 %v334
    %604 = vmatpush1.msra.mxu0 %v333
    %605 = vmatprep.subr.mxu0 %v338
    %606 = vmatpush1.msra.mxu0 %v337
    %607 = vmatprep.subr.mxu0 %v342
    %608 = vmatpush1.msra.mxu0 %v341
    %609 = vmatprep.subr.mxu0 %v346
    %610 = vmatpush1.msra.mxu0 %v345
    %611 = vmatprep.subr.mxu0 0.0
    %612 = vmatpush1.msra.mxu0 0.0
    %613 = vmatprep.subr.mxu0 0.0
    %614 = vmatpush1.msra.mxu0 0.0
    %615 = vmatprep.subr.mxu0 0.0
    %616 = vmatpush1.msra.mxu0 0.0
    %617 = vmatprep.subr.mxu0 0.0
    %618 = vmatpush1.msra.mxu0 0.0
    %619 = vmatprep.subr.mxu0 0.0
    %620 = vmatpush1.msra.mxu0 0.0
    %621 = vmatprep.subr.mxu0 0.0
    %622 = vmatpush1.msra.mxu0 0.0
    %623 = vmatprep.subr.mxu0 0.0
    %624 = vmatpush1.msra.mxu0 0.0
    %625 = vmatprep.subr.mxu0 0.0
    %626 = vmatpush1.msra.mxu0 0.0
    %627 = vmatprep.subr.mxu0 0.0
    %628 = vmatpush1.msra.mxu0 0.0
    %629 = vmatprep.subr.mxu0 0.0
    %630 = vmatpush1.msra.mxu0 0.0
    %631 = vmatprep.subr.mxu0 0.0
    %632 = vmatpush1.msra.mxu0 0.0
    %633 = vmatprep.subr.mxu0 0.0
    %634 = vmatpush1.msra.mxu0 0.0
    %635 = vmatprep.subr.mxu0 0.0
    %636 = vmatpush1.msra.mxu0 0.0
    %637 = vmatprep.subr.mxu0 0.0
    %638 = vmatpush1.msra.mxu0 0.0
    %639 = vmatprep.subr.mxu0 0.0
    %640 = vmatpush1.msra.mxu0 0.0
    %641 = vmatprep.subr.mxu0 0.0
    %642 = vmatpush1.msra.mxu0 0.0
    %643 = vmatprep.mubr.f32.mxu0 0.0
    %644 = vmatmul.mubr.f32.gmra.mrb[0].mxu0 %v507
    %v645 = vpop.f32.mrb[0].mxu0
    %v646 = vadd.f32 0.0, %v645
    %v647 = vpop.f32.mrb[0].mxu0
    %v648 = vadd.f32 0.0, %v647
    %649 = vdwg.mxu0
    %v654 = vrot.slane %v575, 7
    %v655 = vrot.slane %v577, 7
    %v656 = vrot.slane %v646, 7
    %v657 = vrot.slane %v648, 7
    %v662 = vadd.f32 %v208, %v654
    %v663 = vadd.f32 %v210, %v655
    %v664 = vadd.f32 %v279, %v656
    %v665 = vadd.f32 %v281, %v657
    %v666 = vtanh.pop %v662
    %v667 = vtanh.pop %v663
    %v668 = vtanh.pop %v664
    %v669 = vtanh.pop %v665
    %v670 = vmul.f32 %v666, 0.5
    %v671 = vmul.f32 %v667, 0.5
    %v672 = vmul.f32 %v668, 0.5
    %v673 = vadd.f32 %v670, 0.5
    %v674 = vadd.f32 %v671, 0.5
    %v675 = vadd.f32 %v672, 0.5
    %v677 = vrot.slane %v505, 7
    %v679 = vmul.f32 %v674, %v677
    %v680 = vmul.f32 %v673, %v669
    %v681 = vadd.f32 %v679, %v680
    %v682 = vtanh.pop %v681
    %v683 = vmul.f32 %v675, %v682
    %v685 = vrot.slane %v683, 1
    %687 = vmatprep.subr.mxu0 %v284
    %688 = vmatpush1.msra.mxu0 %v283
    %689 = vmatprep.subr.mxu0 %v288
    %690 = vmatpush1.msra.mxu0 %v287
    %691 = vmatprep.subr.mxu0 %v292
    %692 = vmatpush1.msra.mxu0 %v291
    %693 = vmatprep.subr.mxu0 %v296
    %694 = vmatpush1.msra.mxu0 %v295
    %695 = vmatprep.subr.mxu0 %v300
    %696 = vmatpush1.msra.mxu0 %v299
    %697 = vmatprep.subr.mxu0 %v304
    %698 = vmatpush1.msra.mxu0 %v303
    %699 = vmatprep.subr.mxu0 %v308
    %700 = vmatpush1.msra.mxu0 %v307
    %701 = vmatprep.subr.mxu0 %v312
    %702 = vmatpush1.msra.mxu0 %v311
    %703 = vmatprep.subr.mxu0 %v316
    %704 = vmatpush1.msra.mxu0 %v315
    %705 = vmatprep.subr.mxu0 %v320
    %706 = vmatpush1.msra.mxu0 %v319
    %707 = vmatprep.subr.mxu0 %v324
    %708 = vmatpush1.msra.mxu0 %v323
    %709 = vmatprep.subr.mxu0 %v328
    %710 = vmatpush1.msra.mxu0 %v327
    %711 = vmatprep.subr.mxu0 %v332
    %712 = vmatpush1.msra.mxu0 %v331
    %713 = vmatprep.subr.mxu0 %v336
    %714 = vmatpush1.msra.mxu0 %v335
    %715 = vmatprep.subr.mxu0 %v340
    %716 = vmatpush1.msra.mxu0 %v339
    %717 = vmatprep.subr.mxu0 %v344
    %718 = vmatpush1.msra.mxu0 %v343
    %719 = vmatprep.subr.mxu0 0.0
    %720 = vmatpush1.msra.mxu0 0.0
    %721 = vmatprep.subr.mxu0 0.0
    %722 = vmatpush1.msra.mxu0 0.0
    %723 = vmatprep.subr.mxu0 0.0
    %724 = vmatpush1.msra.mxu0 0.0
    %725 = vmatprep.subr.mxu0 0.0
    %726 = vmatpush1.msra.mxu0 0.0
    %727 = vmatprep.subr.mxu0 0.0
    %728 = vmatpush1.msra.mxu0 0.0
    %729 = vmatprep.subr.mxu0 0.0
    %730 = vmatpush1.msra.mxu0 0.0
    %731 = vmatprep.subr.mxu0 0.0
    %732 = vmatpush1.msra.mxu0 0.0
    %733 = vmatprep.subr.mxu0 0.0
    %734 = vmatpush1.msra.mxu0 0.0
    %735 = vmatprep.subr.mxu0 0.0
    %736 = vmatpush1.msra.mxu0 0.0
    %737 = vmatprep.subr.mxu0 0.0
    %738 = vmatpush1.msra.mxu0 0.0
    %739 = vmatprep.subr.mxu0 0.0
    %740 = vmatpush1.msra.mxu0 0.0
    %741 = vmatprep.subr.mxu0 0.0
    %742 = vmatpush1.msra.mxu0 0.0
    %743 = vmatprep.subr.mxu0 0.0
    %744 = vmatpush1.msra.mxu0 0.0
    %745 = vmatprep.subr.mxu0 0.0
    %746 = vmatpush1.msra.mxu0 0.0
    %747 = vmatprep.subr.mxu0 0.0
    %748 = vmatpush1.msra.mxu0 0.0
    %749 = vmatprep.subr.mxu0 0.0
    %750 = vmatpush1.msra.mxu0 0.0
    %751 = vmatprep.mubr.f32.mxu0 0.0
    %752 = vmatmul.mubr.f32.gmra.mrb[0].mxu0 %v685
    %v753 = vpop.f32.mrb[0].mxu0
    %v754 = vadd.f32 0.0, %v753
    %v755 = vpop.f32.mrb[0].mxu0
    %v756 = vadd.f32 0.0, %v755
    %757 = vdwg.mxu0
    %758 = vmatprep.subr.mxu0 %v286
    %759 = vmatpush1.msra.mxu0 %v285
    %760 = vmatprep.subr.mxu0 %v290
    %761 = vmatpush1.msra.mxu0 %v289
    %762 = vmatprep.subr.mxu0 %v294
    %763 = vmatpush1.msra.mxu0 %v293
    %764 = vmatprep.subr.mxu0 %v298
    %765 = vmatpush1.msra.mxu0 %v297
    %766 = vmatprep.subr.mxu0 %v302
    %767 = vmatpush1.msra.mxu0 %v301
    %768 = vmatprep.subr.mxu0 %v306
    %769 = vmatpush1.msra.mxu0 %v305
    %770 = vmatprep.subr.mxu0 %v310
    %771 = vmatpush1.msra.mxu0 %v309
    %772 = vmatprep.subr.mxu0 %v314
    %773 = vmatpush1.msra.mxu0 %v313
    %774 = vmatprep.subr.mxu0 %v318
    %775 = vmatpush1.msra.mxu0 %v317
    %776 = vmatprep.subr.mxu0 %v322
    %777 = vmatpush1.msra.mxu0 %v321
    %778 = vmatprep.subr.mxu0 %v326
    %779 = vmatpush1.msra.mxu0 %v325
    %780 = vmatprep.subr.mxu0 %v330
    %781 = vmatpush1.msra.mxu0 %v329
    %782 = vmatprep.subr.mxu0 %v334
    %783 = vmatpush1.msra.mxu0 %v333
    %784 = vmatprep.subr.mxu0 %v338
    %785 = vmatpush1.msra.mxu0 %v337
    %786 = vmatprep.subr.mxu0 %v342
    %787 = vmatpush1.msra.mxu0 %v341
    %788 = vmatprep.subr.mxu0 %v346
    %789 = vmatpush1.msra.mxu0 %v345
    %790 = vmatprep.subr.mxu0 0.0
    %791 = vmatpush1.msra.mxu0 0.0
    %792 = vmatprep.subr.mxu0 0.0
    %793 = vmatpush1.msra.mxu0 0.0
    %794 = vmatprep.subr.mxu0 0.0
    %795 = vmatpush1.msra.mxu0 0.0
    %796 = vmatprep.subr.mxu0 0.0
    %797 = vmatpush1.msra.mxu0 0.0
    %798 = vmatprep.subr.mxu0 0.0
    %799 = vmatpush1.msra.mxu0 0.0
    %800 = vmatprep.subr.mxu0 0.0
    %801 = vmatpush1.msra.mxu0 0.0
    %802 = vmatprep.subr.mxu0 0.0
    %803 = vmatpush1.msra.mxu0 0.0
    %804 = vmatprep.subr.mxu0 0.0
    %805 = vmatpush1.msra.mxu0 0.0
    %806 = vmatprep.subr.mxu0 0.0
    %807 = vmatpush1.msra.mxu0 0.0
    %808 = vmatprep.subr.mxu0 0.0
    %809 = vmatpush1.msra.mxu0 0.0
    %810 = vmatprep.subr.mxu0 0.0
    %811 = vmatpush1.msra.mxu0 0.0
    %812 = vmatprep.subr.mxu0 0.0
    %813 = vmatpush1.msra.mxu0 0.0
    %814 = vmatprep.subr.mxu0 0.0
    %815 = vmatpush1.msra.mxu0 0.0
    %816 = vmatprep.subr.mxu0 0.0
    %817 = vmatpush1.msra.mxu0 0.0
    %818 = vmatprep.subr.mxu0 0.0
    %819 = vmatpush1.msra.mxu0 0.0
    %820 = vmatprep.subr.mxu0 0.0
    %821 = vmatpush1.msra.mxu0 0.0
    %822 = vmatprep.mubr.f32.mxu0 0.0
    %823 = vmatmul.mubr.f32.gmra.mrb[0].mxu0 %v685
    %v824 = vpop.f32.mrb[0].mxu0
    %v825 = vadd.f32 0.0, %v824
    %v826 = vpop.f32.mrb[0].mxu0
    %v827 = vadd.f32 0.0, %v826
    %828 = vdwg.mxu0
    %v833 = vrot.slane %v754, 6
    %v834 = vrot.slane %v756, 6
    %v835 = vrot.slane %v825, 6
    %v836 = vrot.slane %v827, 6
    %v841 = vadd.f32 %v208, %v833
    %v842 = vadd.f32 %v210, %v834
    %v843 = vadd.f32 %v279, %v835
    %v844 = vadd.f32 %v281, %v836
    %v845 = vtanh.pop %v841
    %v846 = vtanh.pop %v842
    %v847 = vtanh.pop %v843
    %v848 = vtanh.pop %v844
    %v849 = vmul.f32 %v845, 0.5
    %v850 = vmul.f32 %v846, 0.5
    %v851 = vmul.f32 %v847, 0.5
    %v852 = vadd.f32 %v849, 0.5
    %v853 = vadd.f32 %v850, 0.5
    %v854 = vadd.f32 %v851, 0.5
    %v856 = vrot.slane %v681, 7
    %v858 = vmul.f32 %v853, %v856
    %v859 = vmul.f32 %v852, %v848
    %v860 = vadd.f32 %v858, %v859
    %v861 = vtanh.pop %v860
    %v862 = vmul.f32 %v854, %v861
    %v864 = vrot.slane %v862, 2
    %866 = vmatprep.subr.mxu0 %v284
    %867 = vmatpush1.msra.mxu0 %v283
    %868 = vmatprep.subr.mxu0 %v288
    %869 = vmatpush1.msra.mxu0 %v287
    %870 = vmatprep.subr.mxu0 %v292
    %871 = vmatpush1.msra.mxu0 %v291
    %872 = vmatprep.subr.mxu0 %v296
    %873 = vmatpush1.msra.mxu0 %v295
    %874 = vmatprep.subr.mxu0 %v300
    %875 = vmatpush1.msra.mxu0 %v299
    %876 = vmatprep.subr.mxu0 %v304
    %877 = vmatpush1.msra.mxu0 %v303
    %878 = vmatprep.subr.mxu0 %v308
    %879 = vmatpush1.msra.mxu0 %v307
    %880 = vmatprep.subr.mxu0 %v312
    %881 = vmatpush1.msra.mxu0 %v311
    %882 = vmatprep.subr.mxu0 %v316
    %883 = vmatpush1.msra.mxu0 %v315
    %884 = vmatprep.subr.mxu0 %v320
    %885 = vmatpush1.msra.mxu0 %v319
    %886 = vmatprep.subr.mxu0 %v324
    %887 = vmatpush1.msra.mxu0 %v323
    %888 = vmatprep.subr.mxu0 %v328
    %889 = vmatpush1.msra.mxu0 %v327
    %890 = vmatprep.subr.mxu0 %v332
    %891 = vmatpush1.msra.mxu0 %v331
    %892 = vmatprep.subr.mxu0 %v336
    %893 = vmatpush1.msra.mxu0 %v335
    %894 = vmatprep.subr.mxu0 %v340
    %895 = vmatpush1.msra.mxu0 %v339
    %896 = vmatprep.subr.mxu0 %v344
    %897 = vmatpush1.msra.mxu0 %v343
    %898 = vmatprep.subr.mxu0 0.0
    %899 = vmatpush1.msra.mxu0 0.0
    %900 = vmatprep.subr.mxu0 0.0
    %901 = vmatpush1.msra.mxu0 0.0
    %902 = vmatprep.subr.mxu0 0.0
    %903 = vmatpush1.msra.mxu0 0.0
    %904 = vmatprep.subr.mxu0 0.0
    %905 = vmatpush1.msra.mxu0 0.0
    %906 = vmatprep.subr.mxu0 0.0
    %907 = vmatpush1.msra.mxu0 0.0
    %908 = vmatprep.subr.mxu0 0.0
    %909 = vmatpush1.msra.mxu0 0.0
    %910 = vmatprep.subr.mxu0 0.0
    %911 = vmatpush1.msra.mxu0 0.0
    %912 = vmatprep.subr.mxu0 0.0
    %913 = vmatpush1.msra.mxu0 0.0
    %914 = vmatprep.subr.mxu0 0.0
    %915 = vmatpush1.msra.mxu0 0.0
    %916 = vmatprep.subr.mxu0 0.0
    %917 = vmatpush1.msra.mxu0 0.0
    %918 = vmatprep.subr.mxu0 0.0
    %919 = vmatpush1.msra.mxu0 0.0
    %920 = vmatprep.subr.mxu0 0.0
    %921 = vmatpush1.msra.mxu0 0.0
    %922 = vmatprep.subr.mxu0 0.0
    %923 = vmatpush1.msra.mxu0 0.0
    %924 = vmatprep.subr.mxu0 0.0
    %925 = vmatpush1.msra.mxu0 0.0
    %926 = vmatprep.subr.mxu0 0.0
    %927 = vmatpush1.msra.mxu0 0.0
    %928 = vmatprep.subr.mxu0 0.0
    %929 = vmatpush1.msra.mxu0 0.0
    %930 = vmatprep.mubr.f32.mxu0 0.0
    %931 = vmatmul.mubr.f32.gmra.mrb[0].mxu0 %v864
    %v932 = vpop.f32.mrb[0].mxu0
    %v933 = vadd.f32 0.0, %v932
    %v934 = vpop.f32.mrb[0].mxu0
    %v935 = vadd.f32 0.0, %v934
    %936 = vdwg.mxu0
    %937 = vmatprep.subr.mxu0 %v286
    %938 = vmatpush1.msra.mxu0 %v285
    %939 = vmatprep.subr.mxu0 %v290
    %940 = vmatpush1.msra.mxu0 %v289
    %941 = vmatprep.subr.mxu0 %v294
    %942 = vmatpush1.msra.mxu0 %v293
    %943 = vmatprep.subr.mxu0 %v298
    %944 = vmatpush1.msra.mxu0 %v297
    %945 = vmatprep.subr.mxu0 %v302
    %946 = vmatpush1.msra.mxu0 %v301
    %947 = vmatprep.subr.mxu0 %v306
    %948 = vmatpush1.msra.mxu0 %v305
    %949 = vmatprep.subr.mxu0 %v310
    %950 = vmatpush1.msra.mxu0 %v309
    %951 = vmatprep.subr.mxu0 %v314
    %952 = vmatpush1.msra.mxu0 %v313
    %953 = vmatprep.subr.mxu0 %v318
    %954 = vmatpush1.msra.mxu0 %v317
    %955 = vmatprep.subr.mxu0 %v322
    %956 = vmatpush1.msra.mxu0 %v321
    %957 = vmatprep.subr.mxu0 %v326
    %958 = vmatpush1.msra.mxu0 %v325
    %959 = vmatprep.subr.mxu0 %v330
    %960 = vmatpush1.msra.mxu0 %v329
    %961 = vmatprep.subr.mxu0 %v334
    %962 = vmatpush1.msra.mxu0 %v333
    %963 = vmatprep.subr.mxu0 %v338
    %964 = vmatpush1.msra.mxu0 %v337
    %965 = vmatprep.subr.mxu0 %v342
    %966 = vmatpush1.msra.mxu0 %v341
    %967 = vmatprep.subr.mxu0 %v346
    %968 = vmatpush1.msra.mxu0 %v345
    %969 = vmatprep.subr.mxu0 0.0
    %970 = vmatpush1.msra.mxu0 0.0
    %971 = vmatprep.subr.mxu0 0.0
    %972 = vmatpush1.msra.mxu0 0.0
    %973 = vmatprep.subr.mxu0 0.0
    %974 = vmatpush1.msra.mxu0 0.0
    %975 = vmatprep.subr.mxu0 0.0
    %976 = vmatpush1.msra.mxu0 0.0
    %977 = vmatprep.subr.mxu0 0.0
    %978 = vmatpush1.msra.mxu0 0.0
    %979 = vmatprep.subr.mxu0 0.0
    %980 = vmatpush1.msra.mxu0 0.0
    %981 = vmatprep.subr.mxu0 0.0
    %982 = vmatpush1.msra.mxu0 0.0
    %983 = vmatprep.subr.mxu0 0.0
    %984 = vmatpush1.msra.mxu0 0.0
    %985 = vmatprep.subr.mxu0 0.0
    %986 = vmatpush1.msra.mxu0 0.0
    %987 = vmatprep.subr.mxu0 0.0
    %988 = vmatpush1.msra.mxu0 0.0
    %989 = vmatprep.subr.mxu0 0.0
    %990 = vmatpush1.msra.mxu0 0.0
    %991 = vmatprep.subr.mxu0 0.0
    %992 = vmatpush1.msra.mxu0 0.0
    %993 = vmatprep.subr.mxu0 0.0
    %994 = vmatpush1.msra.mxu0 0.0
    %995 = vmatprep.subr.mxu0 0.0
    %996 = vmatpush1.msra.mxu0 0.0
    %997 = vmatprep.subr.mxu0 0.0
    %998 = vmatpush1.msra.mxu0 0.0
    %999 = vmatprep.subr.mxu0 0.0
    %1000 = vmatpush1.msra.mxu0 0.0
    %1001 = vmatprep.mubr.f32.mxu0 0.0
    %1002 = vmatmul.mubr.f32.gmra.mrb[0].mxu0 %v864
    %v1003 = vpop.f32.mrb[0].mxu0
    %v1004 = vadd.f32 0.0, %v1003
    %v1005 = vpop.f32.mrb[0].mxu0
    %v1006 = vadd.f32 0.0, %v1005
    %1007 = vdwg.mxu0
    %v1012 = vrot.slane %v933, 5
    %v1013 = vrot.slane %v935, 5
    %v1014 = vrot.slane %v1004, 5
    %v1015 = vrot.slane %v1006, 5
    %v1020 = vadd.f32 %v208, %v1012
    %v1021 = vadd.f32 %v210, %v1013
    %v1022 = vadd.f32 %v279, %v1014
    %v1023 = vadd.f32 %v281, %v1015
    %v1024 = vtanh.pop %v1020
    %v1025 = vtanh.pop %v1021
    %v1026 = vtanh.pop %v1022
    %v1027 = vtanh.pop %v1023
    %v1028 = vmul.f32 %v1024, 0.5
    %v1029 = vmul.f32 %v1025, 0.5
    %v1030 = vmul.f32 %v1026, 0.5
    %v1031 = vadd.f32 %v1028, 0.5
    %v1032 = vadd.f32 %v1029, 0.5
    %v1033 = vadd.f32 %v1030, 0.5
    %v1035 = vrot.slane %v860, 7
    %v1037 = vmul.f32 %v1032, %v1035
    %v1038 = vmul.f32 %v1031, %v1027
    %v1039 = vadd.f32 %v1037, %v1038
    %v1040 = vtanh.pop %v1039
    %v1041 = vmul.f32 %v1033, %v1040
    %v1043 = vrot.slane %v1041, 3
    %1045 = vmatprep.subr.mxu0 %v284
    %1046 = vmatpush1.msra.mxu0 %v283
    %1047 = vmatprep.subr.mxu0 %v288
    %1048 = vmatpush1.msra.mxu0 %v287
    %1049 = vmatprep.subr.mxu0 %v292
    %1050 = vmatpush1.msra.mxu0 %v291
    %1051 = vmatprep.subr.mxu0 %v296
    %1052 = vmatpush1.msra.mxu0 %v295
    %1053 = vmatprep.subr.mxu0 %v300
    %1054 = vmatpush1.msra.mxu0 %v299
    %1055 = vmatprep.subr.mxu0 %v304
    %1056 = vmatpush1.msra.mxu0 %v303
    %1057 = vmatprep.subr.mxu0 %v308
    %1058 = vmatpush1.msra.mxu0 %v307
    %1059 = vmatprep.subr.mxu0 %v312
    %1060 = vmatpush1.msra.mxu0 %v311
    %1061 = vmatprep.subr.mxu0 %v316
    %1062 = vmatpush1.msra.mxu0 %v315
    %1063 = vmatprep.subr.mxu0 %v320
    %1064 = vmatpush1.msra.mxu0 %v319
    %1065 = vmatprep.subr.mxu0 %v324
    %1066 = vmatpush1.msra.mxu0 %v323
    %1067 = vmatprep.subr.mxu0 %v328
    %1068 = vmatpush1.msra.mxu0 %v327
    %1069 = vmatprep.subr.mxu0 %v332
    %1070 = vmatpush1.msra.mxu0 %v331
    %1071 = vmatprep.subr.mxu0 %v336
    %1072 = vmatpush1.msra.mxu0 %v335
    %1073 = vmatprep.subr.mxu0 %v340
    %1074 = vmatpush1.msra.mxu0 %v339
    %1075 = vmatprep.subr.mxu0 %v344
    %1076 = vmatpush1.msra.mxu0 %v343
    %1077 = vmatprep.subr.mxu0 0.0
    %1078 = vmatpush1.msra.mxu0 0.0
    %1079 = vmatprep.subr.mxu0 0.0
    %1080 = vmatpush1.msra.mxu0 0.0
    %1081 = vmatprep.subr.mxu0 0.0
    %1082 = vmatpush1.msra.mxu0 0.0
    %1083 = vmatprep.subr.mxu0 0.0
    %1084 = vmatpush1.msra.mxu0 0.0
    %1085 = vmatprep.subr.mxu0 0.0
    %1086 = vmatpush1.msra.mxu0 0.0
    %1087 = vmatprep.subr.mxu0 0.0
    %1088 = vmatpush1.msra.mxu0 0.0
    %1089 = vmatprep.subr.mxu0 0.0
    %1090 = vmatpush1.msra.mxu0 0.0
    %1091 = vmatprep.subr.mxu0 0.0
    %1092 = vmatpush1.msra.mxu0 0.0
    %1093 = vmatprep.subr.mxu0 0.0
    %1094 = vmatpush1.msra.mxu0 0.0
    %1095 = vmatprep.subr.mxu0 0.0
    %1096 = vmatpush1.msra.mxu0 0.0
    %1097 = vmatprep.subr.mxu0 0.0
    %1098 = vmatpush1.msra.mxu0 0.0
    %1099 = vmatprep.subr.mxu0 0.0
    %1100 = vmatpush1.msra.mxu0 0.0
    %1101 = vmatprep.subr.mxu0 0.0
    %1102 = vmatpush1.msra.mxu0 0.0
    %1103 = vmatprep.subr.mxu0 0.0
    %1104 = vmatpush1.msra.mxu0 0.0
    %1105 = vmatprep.subr.mxu0 0.0
    %1106 = vmatpush1.msra.mxu0 0.0
    %1107 = vmatprep.subr.mxu0 0.0
    %1108 = vmatpush1.msra.mxu0 0.0
    %1109 = vmatprep.mubr.f32.mxu0 0.0
    %1110 = vmatmul.mubr.f32.gmra.mrb[0].mxu0 %v1043
    %v1111 = vpop.f32.mrb[0].mxu0
    %v1112 = vadd.f32 0.0, %v1111
    %v1113 = vpop.f32.mrb[0].mxu0
    %v1114 = vadd.f32 0.0, %v1113
    %1115 = vdwg.mxu0
    %1116 = vmatprep.subr.mxu0 %v286
    %1117 = vmatpush1.msra.mxu0 %v285
    %1118 = vmatprep.subr.mxu0 %v290
    %1119 = vmatpush1.msra.mxu0 %v289
    %1120 = vmatprep.subr.mxu0 %v294
    %1121 = vmatpush1.msra.mxu0 %v293
    %1122 = vmatprep.subr.mxu0 %v298
    %1123 = vmatpush1.msra.mxu0 %v297
    %1124 = vmatprep.subr.mxu0 %v302
    %1125 = vmatpush1.msra.mxu0 %v301
    %1126 = vmatprep.subr.mxu0 %v306
    %1127 = vmatpush1.msra.mxu0 %v305
    %1128 = vmatprep.subr.mxu0 %v310
    %1129 = vmatpush1.msra.mxu0 %v309
    %1130 = vmatprep.subr.mxu0 %v314
    %1131 = vmatpush1.msra.mxu0 %v313
    %1132 = vmatprep.subr.mxu0 %v318
    %1133 = vmatpush1.msra.mxu0 %v317
    %1134 = vmatprep.subr.mxu0 %v322
    %1135 = vmatpush1.msra.mxu0 %v321
    %1136 = vmatprep.subr.mxu0 %v326
    %1137 = vmatpush1.msra.mxu0 %v325
    %1138 = vmatprep.subr.mxu0 %v330
    %1139 = vmatpush1.msra.mxu0 %v329
    %1140 = vmatprep.subr.mxu0 %v334
    %1141 = vmatpush1.msra.mxu0 %v333
    %1142 = vmatprep.subr.mxu0 %v338
    %1143 = vmatpush1.msra.mxu0 %v337
    %1144 = vmatprep.subr.mxu0 %v342
    %1145 = vmatpush1.msra.mxu0 %v341
    %1146 = vmatprep.subr.mxu0 %v346
    %1147 = vmatpush1.msra.mxu0 %v345
    %1148 = vmatprep.subr.mxu0 0.0
    %1149 = vmatpush1.msra.mxu0 0.0
    %1150 = vmatprep.subr.mxu0 0.0
    %1151 = vmatpush1.msra.mxu0 0.0
    %1152 = vmatprep.subr.mxu0 0.0
    %1153 = vmatpush1.msra.mxu0 0.0
    %1154 = vmatprep.subr.mxu0 0.0
    %1155 = vmatpush1.msra.mxu0 0.0
    %1156 = vmatprep.subr.mxu0 0.0
    %1157 = vmatpush1.msra.mxu0 0.0
    %1158 = vmatprep.subr.mxu0 0.0
    %1159 = vmatpush1.msra.mxu0 0.0
    %1160 = vmatprep.subr.mxu0 0.0
    %1161 = vmatpush1.msra.mxu0 0.0
    %1162 = vmatprep.subr.mxu0 0.0
    %1163 = vmatpush1.msra.mxu0 0.0
    %1164 = vmatprep.subr.mxu0 0.0
    %1165 = vmatpush1.msra.mxu0 0.0
    %1166 = vmatprep.subr.mxu0 0.0
    %1167 = vmatpush1.msra.mxu0 0.0
    %1168 = vmatprep.subr.mxu0 0.0
    %1169 = vmatpush1.msra.mxu0 0.0
    %1170 = vmatprep.subr.mxu0 0.0
    %1171 = vmatpush1.msra.mxu0 0.0
    %1172 = vmatprep.subr.mxu0 0.0
    %1173 = vmatpush1.msra.mxu0 0.0
    %1174 = vmatprep.subr.mxu0 0.0
    %1175 = vmatpush1.msra.mxu0 0.0
    %1176 = vmatprep.subr.mxu0 0.0
    %1177 = vmatpush1.msra.mxu0 0.0
    %1178 = vmatprep.subr.mxu0 0.0
    %1179 = vmatpush1.msra.mxu0 0.0
    %1180 = vmatprep.mubr.f32.mxu0 0.0
    %1181 = vmatmul.mubr.f32.gmra.mrb[0].mxu0 %v1043
    %v1182 = vpop.f32.mrb[0].mxu0
    %v1183 = vadd.f32 0.0, %v1182
    %v1184 = vpop.f32.mrb[0].mxu0
    %v1185 = vadd.f32 0.0, %v1184
    %1186 = vdwg.mxu0
    %v1191 = vrot.slane %v1112, 4
    %v1192 = vrot.slane %v1114, 4
    %v1193 = vrot.slane %v1183, 4
    %v1194 = vrot.slane %v1185, 4
    %v1199 = vadd.f32 %v208, %v1191
    %v1200 = vadd.f32 %v210, %v1192
    %v1201 = vadd.f32 %v279, %v1193
    %v1202 = vadd.f32 %v281, %v1194
    %v1203 = vtanh.pop %v1199
    %v1204 = vtanh.pop %v1200
    %v1205 = vtanh.pop %v1201
    %v1206 = vtanh.pop %v1202
    %v1207 = vmul.f32 %v1203, 0.5
    %v1208 = vmul.f32 %v1204, 0.5
    %v1209 = vmul.f32 %v1205, 0.5
    %v1210 = vadd.f32 %v1207, 0.5
    %v1211 = vadd.f32 %v1208, 0.5
    %v1212 = vadd.f32 %v1209, 0.5
    %v1214 = vrot.slane %v1039, 7
    %v1216 = vmul.f32 %v1211, %v1214
    %v1217 = vmul.f32 %v1210, %v1206
    %v1218 = vadd.f32 %v1216, %v1217
    %v1219 = vtanh.pop %v1218
    %v1220 = vmul.f32 %v1212, %v1219
    %v1222 = vrot.slane %v1220, 4
    %1224 = vmatprep.subr.mxu0 %v284
    %1225 = vmatpush1.msra.mxu0 %v283
    %1226 = vmatprep.subr.mxu0 %v288
    %1227 = vmatpush1.msra.mxu0 %v287
    %1228 = vmatprep.subr.mxu0 %v292
    %1229 = vmatpush1.msra.mxu0 %v291
    %1230 = vmatprep.subr.mxu0 %v296
    %1231 = vmatpush1.msra.mxu0 %v295
    %1232 = vmatprep.subr.mxu0 %v300
    %1233 = vmatpush1.msra.mxu0 %v299
    %1234 = vmatprep.subr.mxu0 %v304
    %1235 = vmatpush1.msra.mxu0 %v303
    %1236 = vmatprep.subr.mxu0 %v308
    %1237 = vmatpush1.msra.mxu0 %v307
    %1238 = vmatprep.subr.mxu0 %v312
    %1239 = vmatpush1.msra.mxu0 %v311
    %1240 = vmatprep.subr.mxu0 %v316
    %1241 = vmatpush1.msra.mxu0 %v315
    %1242 = vmatprep.subr.mxu0 %v320
    %1243 = vmatpush1.msra.mxu0 %v319
    %1244 = vmatprep.subr.mxu0 %v324
    %1245 = vmatpush1.msra.mxu0 %v323
    %1246 = vmatprep.subr.mxu0 %v328
    %1247 = vmatpush1.msra.mxu0 %v327
    %1248 = vmatprep.subr.mxu0 %v332
    %1249 = vmatpush1.msra.mxu0 %v331
    %1250 = vmatprep.subr.mxu0 %v336
    %1251 = vmatpush1.msra.mxu0 %v335
    %1252 = vmatprep.subr.mxu0 %v340
    %1253 = vmatpush1.msra.mxu0 %v339
    %1254 = vmatprep.subr.mxu0 %v344
    %1255 = vmatpush1.msra.mxu0 %v343
    %1256 = vmatprep.subr.mxu0 0.0
    %1257 = vmatpush1.msra.mxu0 0.0
    %1258 = vmatprep.subr.mxu0 0.0
    %1259 = vmatpush1.msra.mxu0 0.0
    %1260 = vmatprep.subr.mxu0 0.0
    %1261 = vmatpush1.msra.mxu0 0.0
    %1262 = vmatprep.subr.mxu0 0.0
    %1263 = vmatpush1.msra.mxu0 0.0
    %1264 = vmatprep.subr.mxu0 0.0
    %1265 = vmatpush1.msra.mxu0 0.0
    %1266 = vmatprep.subr.mxu0 0.0
    %1267 = vmatpush1.msra.mxu0 0.0
    %1268 = vmatprep.subr.mxu0 0.0
    %1269 = vmatpush1.msra.mxu0 0.0
    %1270 = vmatprep.subr.mxu0 0.0
    %1271 = vmatpush1.msra.mxu0 0.0
    %1272 = vmatprep.subr.mxu0 0.0
    %1273 = vmatpush1.msra.mxu0 0.0
    %1274 = vmatprep.subr.mxu0 0.0
    %1275 = vmatpush1.msra.mxu0 0.0
    %1276 = vmatprep.subr.mxu0 0.0
    %1277 = vmatpush1.msra.mxu0 0.0
    %1278 = vmatprep.subr.mxu0 0.0
    %1279 = vmatpush1.msra.mxu0 0.0
    %1280 = vmatprep.subr.mxu0 0.0
    %1281 = vmatpush1.msra.mxu0 0.0
    %1282 = vmatprep.subr.mxu0 0.0
    %1283 = vmatpush1.msra.mxu0 0.0
    %1284 = vmatprep.subr.mxu0 0.0
    %1285 = vmatpush1.msra.mxu0 0.0
    %1286 = vmatprep.subr.mxu0 0.0
    %1287 = vmatpush1.msra.mxu0 0.0
    %1288 = vmatprep.mubr.f32.mxu0 0.0
    %1289 = vmatmul.mubr.f32.gmra.mrb[0].mxu0 %v1222
    %v1290 = vpop.f32.mrb[0].mxu0
    %v1291 = vadd.f32 0.0, %v1290
    %v1292 = vpop.f32.mrb[0].mxu0
    %v1293 = vadd.f32 0.0, %v1292
    %1294 = vdwg.mxu0
    %1295 = vmatprep.subr.mxu0 %v286
    %1296 = vmatpush1.msra.mxu0 %v285
    %1297 = vmatprep.subr.mxu0 %v290
    %1298 = vmatpush1.msra.mxu0 %v289
    %1299 = vmatprep.subr.mxu0 %v294
    %1300 = vmatpush1.msra.mxu0 %v293
    %1301 = vmatprep.subr.mxu0 %v298
    %1302 = vmatpush1.msra.mxu0 %v297
    %1303 = vmatprep.subr.mxu0 %v302
    %1304 = vmatpush1.msra.mxu0 %v301
    %1305 = vmatprep.subr.mxu0 %v306
    %1306 = vmatpush1.msra.mxu0 %v305
    %1307 = vmatprep.subr.mxu0 %v310
    %1308 = vmatpush1.msra.mxu0 %v309
    %1309 = vmatprep.subr.mxu0 %v314
    %1310 = vmatpush1.msra.mxu0 %v313
    %1311 = vmatprep.subr.mxu0 %v318
    %1312 = vmatpush1.msra.mxu0 %v317
    %1313 = vmatprep.subr.mxu0 %v322
    %1314 = vmatpush1.msra.mxu0 %v321
    %1315 = vmatprep.subr.mxu0 %v326
    %1316 = vmatpush1.msra.mxu0 %v325
    %1317 = vmatprep.subr.mxu0 %v330
    %1318 = vmatpush1.msra.mxu0 %v329
    %1319 = vmatprep.subr.mxu0 %v334
    %1320 = vmatpush1.msra.mxu0 %v333
    %1321 = vmatprep.subr.mxu0 %v338
    %1322 = vmatpush1.msra.mxu0 %v337
    %1323 = vmatprep.subr.mxu0 %v342
    %1324 = vmatpush1.msra.mxu0 %v341
    %1325 = vmatprep.subr.mxu0 %v346
    %1326 = vmatpush1.msra.mxu0 %v345
    %1327 = vmatprep.subr.mxu0 0.0
    %1328 = vmatpush1.msra.mxu0 0.0
    %1329 = vmatprep.subr.mxu0 0.0
    %1330 = vmatpush1.msra.mxu0 0.0
    %1331 = vmatprep.subr.mxu0 0.0
    %1332 = vmatpush1.msra.mxu0 0.0
    %1333 = vmatprep.subr.mxu0 0.0
    %1334 = vmatpush1.msra.mxu0 0.0
    %1335 = vmatprep.subr.mxu0 0.0
    %1336 = vmatpush1.msra.mxu0 0.0
    %1337 = vmatprep.subr.mxu0 0.0
    %1338 = vmatpush1.msra.mxu0 0.0
    %1339 = vmatprep.subr.mxu0 0.0
    %1340 = vmatpush1.msra.mxu0 0.0
    %1341 = vmatprep.subr.mxu0 0.0
    %1342 = vmatpush1.msra.mxu0 0.0
    %1343 = vmatprep.subr.mxu0 0.0
    %1344 = vmatpush1.msra.mxu0 0.0
    %1345 = vmatprep.subr.mxu0 0.0
    %1346 = vmatpush1.msra.mxu0 0.0
    %1347 = vmatprep.subr.mxu0 0.0
    %1348 = vmatpush1.msra.mxu0 0.0
    %1349 = vmatprep.subr.mxu0 0.0
    %1350 = vmatpush1.msra.mxu0 0.0
    %1351 = vmatprep.subr.mxu0 0.0
    %1352 = vmatpush1.msra.mxu0 0.0
    %1353 = vmatprep.subr.mxu0 0.0
    %1354 = vmatpush1.msra.mxu0 0.0
    %1355 = vmatprep.subr.mxu0 0.0
    %1356 = vmatpush1.msra.mxu0 0.0
    %1357 = vmatprep.subr.mxu0 0.0
    %1358 = vmatpush1.msra.mxu0 0.0
    %1359 = vmatprep.mubr.f32.mxu0 0.0
    %1360 = vmatmul.mubr.f32.gmra.mrb[0].mxu0 %v1222
    %v1361 = vpop.f32.mrb[0].mxu0
    %v1362 = vadd.f32 0.0, %v1361
    %v1363 = vpop.f32.mrb[0].mxu0
    %v1364 = vadd.f32 0.0, %v1363
    %1365 = vdwg.mxu0
    %v1370 = vrot.slane %v1291, 3
    %v1371 = vrot.slane %v1293, 3
    %v1372 = vrot.slane %v1362, 3
    %v1373 = vrot.slane %v1364, 3
    %v1378 = vadd.f32 %v208, %v1370
    %v1379 = vadd.f32 %v210, %v1371
    %v1380 = vadd.f32 %v279, %v1372
    %v1381 = vadd.f32 %v281, %v1373
    %v1382 = vtanh.pop %v1378
    %v1383 = vtanh.pop %v1379
    %v1384 = vtanh.pop %v1380
    %v1385 = vtanh.pop %v1381
    %v1386 = vmul.f32 %v1382, 0.5
    %v1387 = vmul.f32 %v1383, 0.5
    %v1388 = vmul.f32 %v1384, 0.5
    %v1389 = vadd.f32 %v1386, 0.5
    %v1390 = vadd.f32 %v1387, 0.5
    %v1391 = vadd.f32 %v1388, 0.5
    %v1393 = vrot.slane %v1218, 7
    %v1395 = vmul.f32 %v1390, %v1393
    %v1396 = vmul.f32 %v1389, %v1385
    %v1397 = vadd.f32 %v1395, %v1396
    %v1398 = vtanh.pop %v1397
    %v1399 = vmul.f32 %v1391, %v1398
    %v1401 = vrot.slane %v1399, 5
    %1403 = vmatprep.subr.mxu0 %v284
    %1404 = vmatpush1.msra.mxu0 %v283
    %1405 = vmatprep.subr.mxu0 %v288
    %1406 = vmatpush1.msra.mxu0 %v287
    %1407 = vmatprep.subr.mxu0 %v292
    %1408 = vmatpush1.msra.mxu0 %v291
    %1409 = vmatprep.subr.mxu0 %v296
    %1410 = vmatpush1.msra.mxu0 %v295
    %1411 = vmatprep.subr.mxu0 %v300
    %1412 = vmatpush1.msra.mxu0 %v299
    %1413 = vmatprep.subr.mxu0 %v304
    %1414 = vmatpush1.msra.mxu0 %v303
    %1415 = vmatprep.subr.mxu0 %v308
    %1416 = vmatpush1.msra.mxu0 %v307
    %1417 = vmatprep.subr.mxu0 %v312
    %1418 = vmatpush1.msra.mxu0 %v311
    %1419 = vmatprep.subr.mxu0 %v316
    %1420 = vmatpush1.msra.mxu0 %v315
    %1421 = vmatprep.subr.mxu0 %v320
    %1422 = vmatpush1.msra.mxu0 %v319
    %1423 = vmatprep.subr.mxu0 %v324
    %1424 = vmatpush1.msra.mxu0 %v323
    %1425 = vmatprep.subr.mxu0 %v328
    %1426 = vmatpush1.msra.mxu0 %v327
    %1427 = vmatprep.subr.mxu0 %v332
    %1428 = vmatpush1.msra.mxu0 %v331
    %1429 = vmatprep.subr.mxu0 %v336
    %1430 = vmatpush1.msra.mxu0 %v335
    %1431 = vmatprep.subr.mxu0 %v340
    %1432 = vmatpush1.msra.mxu0 %v339
    %1433 = vmatprep.subr.mxu0 %v344
    %1434 = vmatpush1.msra.mxu0 %v343
    %1435 = vmatprep.subr.mxu0 0.0
    %1436 = vmatpush1.msra.mxu0 0.0
    %1437 = vmatprep.subr.mxu0 0.0
    %1438 = vmatpush1.msra.mxu0 0.0
    %1439 = vmatprep.subr.mxu0 0.0
    %1440 = vmatpush1.msra.mxu0 0.0
    %1441 = vmatprep.subr.mxu0 0.0
    %1442 = vmatpush1.msra.mxu0 0.0
    %1443 = vmatprep.subr.mxu0 0.0
    %1444 = vmatpush1.msra.mxu0 0.0
    %1445 = vmatprep.subr.mxu0 0.0
    %1446 = vmatpush1.msra.mxu0 0.0
    %1447 = vmatprep.subr.mxu0 0.0
    %1448 = vmatpush1.msra.mxu0 0.0
    %1449 = vmatprep.subr.mxu0 0.0
    %1450 = vmatpush1.msra.mxu0 0.0
    %1451 = vmatprep.subr.mxu0 0.0
    %1452 = vmatpush1.msra.mxu0 0.0
    %1453 = vmatprep.subr.mxu0 0.0
    %1454 = vmatpush1.msra.mxu0 0.0
    %1455 = vmatprep.subr.mxu0 0.0
    %1456 = vmatpush1.msra.mxu0 0.0
    %1457 = vmatprep.subr.mxu0 0.0
    %1458 = vmatpush1.msra.mxu0 0.0
    %1459 = vmatprep.subr.mxu0 0.0
    %1460 = vmatpush1.msra.mxu0 0.0
    %1461 = vmatprep.subr.mxu0 0.0
    %1462 = vmatpush1.msra.mxu0 0.0
    %1463 = vmatprep.subr.mxu0 0.0
    %1464 = vmatpush1.msra.mxu0 0.0
    %1465 = vmatprep.subr.mxu0 0.0
    %1466 = vmatpush1.msra.mxu0 0.0
    %1467 = vmatprep.mubr.f32.mxu0 0.0
    %1468 = vmatmul.mubr.f32.gmra.mrb[0].mxu0 %v1401
    %v1469 = vpop.f32.mrb[0].mxu0
    %v1470 = vadd.f32 0.0, %v1469
    %v1471 = vpop.f32.mrb[0].mxu0
    %v1472 = vadd.f32 0.0, %v1471
    %1473 = vdwg.mxu0
    %1474 = vmatprep.subr.mxu0 %v286
    %1475 = vmatpush1.msra.mxu0 %v285
    %1476 = vmatprep.subr.mxu0 %v290
    %1477 = vmatpush1.msra.mxu0 %v289
    %1478 = vmatprep.subr.mxu0 %v294
    %1479 = vmatpush1.msra.mxu0 %v293
    %1480 = vmatprep.subr.mxu0 %v298
    %1481 = vmatpush1.msra.mxu0 %v297
    %1482 = vmatprep.subr.mxu0 %v302
    %1483 = vmatpush1.msra.mxu0 %v301
    %1484 = vmatprep.subr.mxu0 %v306
    %1485 = vmatpush1.msra.mxu0 %v305
    %1486 = vmatprep.subr.mxu0 %v310
    %1487 = vmatpush1.msra.mxu0 %v309
    %1488 = vmatprep.subr.mxu0 %v314
    %1489 = vmatpush1.msra.mxu0 %v313
    %1490 = vmatprep.subr.mxu0 %v318
    %1491 = vmatpush1.msra.mxu0 %v317
    %1492 = vmatprep.subr.mxu0 %v322
    %1493 = vmatpush1.msra.mxu0 %v321
    %1494 = vmatprep.subr.mxu0 %v326
    %1495 = vmatpush1.msra.mxu0 %v325
    %1496 = vmatprep.subr.mxu0 %v330
    %1497 = vmatpush1.msra.mxu0 %v329
    %1498 = vmatprep.subr.mxu0 %v334
    %1499 = vmatpush1.msra.mxu0 %v333
    %1500 = vmatprep.subr.mxu0 %v338
    %1501 = vmatpush1.msra.mxu0 %v337
    %1502 = vmatprep.subr.mxu0 %v342
    %1503 = vmatpush1.msra.mxu0 %v341
    %1504 = vmatprep.subr.mxu0 %v346
    %1505 = vmatpush1.msra.mxu0 %v345
    %1506 = vmatprep.subr.mxu0 0.0
    %1507 = vmatpush1.msra.mxu0 0.0
    %1508 = vmatprep.subr.mxu0 0.0
    %1509 = vmatpush1.msra.mxu0 0.0
    %1510 = vmatprep.subr.mxu0 0.0
    %1511 = vmatpush1.msra.mxu0 0.0
    %1512 = vmatprep.subr.mxu0 0.0
    %1513 = vmatpush1.msra.mxu0 0.0
    %1514 = vmatprep.subr.mxu0 0.0
    %1515 = vmatpush1.msra.mxu0 0.0
    %1516 = vmatprep.subr.mxu0 0.0
    %1517 = vmatpush1.msra.mxu0 0.0
    %1518 = vmatprep.subr.mxu0 0.0
    %1519 = vmatpush1.msra.mxu0 0.0
    %1520 = vmatprep.subr.mxu0 0.0
    %1521 = vmatpush1.msra.mxu0 0.0
    %1522 = vmatprep.subr.mxu0 0.0
    %1523 = vmatpush1.msra.mxu0 0.0
    %1524 = vmatprep.subr.mxu0 0.0
    %1525 = vmatpush1.msra.mxu0 0.0
    %1526 = vmatprep.subr.mxu0 0.0
    %1527 = vmatpush1.msra.mxu0 0.0
    %1528 = vmatprep.subr.mxu0 0.0
    %1529 = vmatpush1.msra.mxu0 0.0
    %1530 = vmatprep.subr.mxu0 0.0
    %1531 = vmatpush1.msra.mxu0 0.0
    %1532 = vmatprep.subr.mxu0 0.0
    %1533 = vmatpush1.msra.mxu0 0.0
    %1534 = vmatprep.subr.mxu0 0.0
    %1535 = vmatpush1.msra.mxu0 0.0
    %1536 = vmatprep.subr.mxu0 0.0
    %1537 = vmatpush1.msra.mxu0 0.0
    %1538 = vmatprep.mubr.f32.mxu0 0.0
    %1539 = vmatmul.mubr.f32.gmra.mrb[0].mxu0 %v1401
    %v1540 = vpop.f32.mrb[0].mxu0
    %v1541 = vadd.f32 0.0, %v1540
    %v1542 = vpop.f32.mrb[0].mxu0
    %v1543 = vadd.f32 0.0, %v1542
    %1544 = vdwg.mxu0
    %v1549 = vrot.slane %v1470, 2
    %v1550 = vrot.slane %v1472, 2
    %v1551 = vrot.slane %v1541, 2
    %v1552 = vrot.slane %v1543, 2
    %v1557 = vadd.f32 %v208, %v1549
    %v1558 = vadd.f32 %v210, %v1550
    %v1559 = vadd.f32 %v279, %v1551
    %v1560 = vadd.f32 %v281, %v1552
    %v1561 = vtanh.pop %v1557
    %v1562 = vtanh.pop %v1558
    %v1563 = vtanh.pop %v1559
    %v1564 = vtanh.pop %v1560
    %v1565 = vmul.f32 %v1561, 0.5
    %v1566 = vmul.f32 %v1562, 0.5
    %v1567 = vmul.f32 %v1563, 0.5
    %v1568 = vadd.f32 %v1565, 0.5
    %v1569 = vadd.f32 %v1566, 0.5
    %v1570 = vadd.f32 %v1567, 0.5
    %v1572 = vrot.slane %v1397, 7
    %v1574 = vmul.f32 %v1569, %v1572
    %v1575 = vmul.f32 %v1568, %v1564
    %v1576 = vadd.f32 %v1574, %v1575
    %v1577 = vtanh.pop %v1576
    %v1578 = vmul.f32 %v1570, %v1577
    %v1580 = vrot.slane %v1578, 6
    %1582 = vmatprep.subr.mxu0 %v284
    %1583 = vmatpush1.msra.mxu0 %v283
    %1584 = vmatprep.subr.mxu0 %v288
    %1585 = vmatpush1.msra.mxu0 %v287
    %1586 = vmatprep.subr.mxu0 %v292
    %1587 = vmatpush1.msra.mxu0 %v291
    %1588 = vmatprep.subr.mxu0 %v296
    %1589 = vmatpush1.msra.mxu0 %v295
    %1590 = vmatprep.subr.mxu0 %v300
    %1591 = vmatpush1.msra.mxu0 %v299
    %1592 = vmatprep.subr.mxu0 %v304
    %1593 = vmatpush1.msra.mxu0 %v303
    %1594 = vmatprep.subr.mxu0 %v308
    %1595 = vmatpush1.msra.mxu0 %v307
    %1596 = vmatprep.subr.mxu0 %v312
    %1597 = vmatpush1.msra.mxu0 %v311
    %1598 = vmatprep.subr.mxu0 %v316
    %1599 = vmatpush1.msra.mxu0 %v315
    %1600 = vmatprep.subr.mxu0 %v320
    %1601 = vmatpush1.msra.mxu0 %v319
    %1602 = vmatprep.subr.mxu0 %v324
    %1603 = vmatpush1.msra.mxu0 %v323
    %1604 = vmatprep.subr.mxu0 %v328
    %1605 = vmatpush1.msra.mxu0 %v327
    %1606 = vmatprep.subr.mxu0 %v332
    %1607 = vmatpush1.msra.mxu0 %v331
    %1608 = vmatprep.subr.mxu0 %v336
    %1609 = vmatpush1.msra.mxu0 %v335
    %1610 = vmatprep.subr.mxu0 %v340
    %1611 = vmatpush1.msra.mxu0 %v339
    %1612 = vmatprep.subr.mxu0 %v344
    %1613 = vmatpush1.msra.mxu0 %v343
    %1614 = vmatprep.subr.mxu0 0.0
    %1615 = vmatpush1.msra.mxu0 0.0
    %1616 = vmatprep.subr.mxu0 0.0
    %1617 = vmatpush1.msra.mxu0 0.0
    %1618 = vmatprep.subr.mxu0 0.0
    %1619 = vmatpush1.msra.mxu0 0.0
    %1620 = vmatprep.subr.mxu0 0.0
    %1621 = vmatpush1.msra.mxu0 0.0
    %1622 = vmatprep.subr.mxu0 0.0
    %1623 = vmatpush1.msra.mxu0 0.0
    %1624 = vmatprep.subr.mxu0 0.0
    %1625 = vmatpush1.msra.mxu0 0.0
    %1626 = vmatprep.subr.mxu0 0.0
    %1627 = vmatpush1.msra.mxu0 0.0
    %1628 = vmatprep.subr.mxu0 0.0
    %1629 = vmatpush1.msra.mxu0 0.0
    %1630 = vmatprep.subr.mxu0 0.0
    %1631 = vmatpush1.msra.mxu0 0.0
    %1632 = vmatprep.subr.mxu0 0.0
    %1633 = vmatpush1.msra.mxu0 0.0
    %1634 = vmatprep.subr.mxu0 0.0
    %1635 = vmatpush1.msra.mxu0 0.0
    %1636 = vmatprep.subr.mxu0 0.0
    %1637 = vmatpush1.msra.mxu0 0.0
    %1638 = vmatprep.subr.mxu0 0.0
    %1639 = vmatpush1.msra.mxu0 0.0
    %1640 = vmatprep.subr.mxu0 0.0
    %1641 = vmatpush1.msra.mxu0 0.0
    %1642 = vmatprep.subr.mxu0 0.0
    %1643 = vmatpush1.msra.mxu0 0.0
    %1644 = vmatprep.subr.mxu0 0.0
    %1645 = vmatpush1.msra.mxu0 0.0
    %1646 = vmatprep.mubr.f32.mxu0 0.0
    %1647 = vmatmul.mubr.f32.gmra.mrb[0].mxu0 %v1580
    %v1648 = vpop.f32.mrb[0].mxu0
    %v1649 = vadd.f32 0.0, %v1648
    %v1650 = vpop.f32.mrb[0].mxu0
    %v1651 = vadd.f32 0.0, %v1650
    %1652 = vdwg.mxu0
    %1653 = vmatprep.subr.mxu0 %v286
    %1654 = vmatpush1.msra.mxu0 %v285
    %1655 = vmatprep.subr.mxu0 %v290
    %1656 = vmatpush1.msra.mxu0 %v289
    %1657 = vmatprep.subr.mxu0 %v294
    %1658 = vmatpush1.msra.mxu0 %v293
    %1659 = vmatprep.subr.mxu0 %v298
    %1660 = vmatpush1.msra.mxu0 %v297
    %1661 = vmatprep.subr.mxu0 %v302
    %1662 = vmatpush1.msra.mxu0 %v301
    %1663 = vmatprep.subr.mxu0 %v306
    %1664 = vmatpush1.msra.mxu0 %v305
    %1665 = vmatprep.subr.mxu0 %v310
    %1666 = vmatpush1.msra.mxu0 %v309
    %1667 = vmatprep.subr.mxu0 %v314
    %1668 = vmatpush1.msra.mxu0 %v313
    %1669 = vmatprep.subr.mxu0 %v318
    %1670 = vmatpush1.msra.mxu0 %v317
    %1671 = vmatprep.subr.mxu0 %v322
    %1672 = vmatpush1.msra.mxu0 %v321
    %1673 = vmatprep.subr.mxu0 %v326
    %1674 = vmatpush1.msra.mxu0 %v325
    %1675 = vmatprep.subr.mxu0 %v330
    %1676 = vmatpush1.msra.mxu0 %v329
    %1677 = vmatprep.subr.mxu0 %v334
    %1678 = vmatpush1.msra.mxu0 %v333
    %1679 = vmatprep.subr.mxu0 %v338
    %1680 = vmatpush1.msra.mxu0 %v337
    %1681 = vmatprep.subr.mxu0 %v342
    %1682 = vmatpush1.msra.mxu0 %v341
    %1683 = vmatprep.subr.mxu0 %v346
    %1684 = vmatpush1.msra.mxu0 %v345
    %1685 = vmatprep.subr.mxu0 0.0
    %1686 = vmatpush1.msra.mxu0 0.0
    %1687 = vmatprep.subr.mxu0 0.0
    %1688 = vmatpush1.msra.mxu0 0.0
    %1689 = vmatprep.subr.mxu0 0.0
    %1690 = vmatpush1.msra.mxu0 0.0
    %1691 = vmatprep.subr.mxu0 0.0
    %1692 = vmatpush1.msra.mxu0 0.0
    %1693 = vmatprep.subr.mxu0 0.0
    %1694 = vmatpush1.msra.mxu0 0.0
    %1695 = vmatprep.subr.mxu0 0.0
    %1696 = vmatpush1.msra.mxu0 0.0
    %1697 = vmatprep.subr.mxu0 0.0
    %1698 = vmatpush1.msra.mxu0 0.0
    %1699 = vmatprep.subr.mxu0 0.0
    %1700 = vmatpush1.msra.mxu0 0.0
    %1701 = vmatprep.subr.mxu0 0.0
    %1702 = vmatpush1.msra.mxu0 0.0
    %1703 = vmatprep.subr.mxu0 0.0
    %1704 = vmatpush1.msra.mxu0 0.0
    %1705 = vmatprep.subr.mxu0 0.0
    %1706 = vmatpush1.msra.mxu0 0.0
    %1707 = vmatprep.subr.mxu0 0.0
    %1708 = vmatpush1.msra.mxu0 0.0
    %1709 = vmatprep.subr.mxu0 0.0
    %1710 = vmatpush1.msra.mxu0 0.0
    %1711 = vmatprep.subr.mxu0 0.0
    %1712 = vmatpush1.msra.mxu0 0.0
    %1713 = vmatprep.subr.mxu0 0.0
    %1714 = vmatpush1.msra.mxu0 0.0
    %1715 = vmatprep.subr.mxu0 0.0
    %1716 = vmatpush1.msra.mxu0 0.0
    %1717 = vmatprep.mubr.f32.mxu0 0.0
    %1718 = vmatmul.mubr.f32.gmra.mrb[0].mxu0 %v1580
    %v1719 = vpop.f32.mrb[0].mxu0
    %v1720 = vadd.f32 0.0, %v1719
    %v1721 = vpop.f32.mrb[0].mxu0
    %v1722 = vadd.f32 0.0, %v1721
    %1723 = vdwg.mxu0
    %v1728 = vrot.slane %v1649, 1
    %v1729 = vrot.slane %v1651, 1
    %v1730 = vrot.slane %v1720, 1
    %v1731 = vrot.slane %v1722, 1
    %v1736 = vadd.f32 %v208, %v1728
    %v1737 = vadd.f32 %v210, %v1729
    %v1738 = vadd.f32 %v279, %v1730
    %v1739 = vadd.f32 %v281, %v1731
    %v1740 = vtanh.pop %v1736
    %v1741 = vtanh.pop %v1737
    %v1742 = vtanh.pop %v1738
    %v1743 = vtanh.pop %v1739
    %v1744 = vmul.f32 %v1740, 0.5
    %v1745 = vmul.f32 %v1741, 0.5
    %v1746 = vmul.f32 %v1742, 0.5
    %v1747 = vadd.f32 %v1744, 0.5
    %v1748 = vadd.f32 %v1745, 0.5
    %v1749 = vadd.f32 %v1746, 0.5
    %v1751 = vrot.slane %v1576, 7
    %v1753 = vmul.f32 %v1748, %v1751
    %v1754 = vmul.f32 %v1747, %v1743
    %v1755 = vadd.f32 %v1753, %v1754
    %v1756 = vtanh.pop %v1755
    %v1757 = vmul.f32 %v1749, %v1756
    %v1758 = vld [vmem:[%s4] sm:$0xff]
    %v1759 = vld [vmem:[%s4 + $0x8] sm:$0xff]
    %v1760 = vld [vmem:[%s4 + $0x10] sm:$0xff]
    %v1761 = vld [vmem:[%s4 + $0x18] sm:$0xff]
    %v1762 = vld [vmem:[%s4 + $0x20] sm:$0xff]
    %v1763 = vld [vmem:[%s4 + $0x28] sm:$0xff]
    %v1764 = vld [vmem:[%s4 + $0x30] sm:$0xff]
    %v1765 = vld [vmem:[%s4 + $0x38] sm:$0xff]
    %v1766 = vld [vmem:[%s4 + $0x40] sm:$0xff]
    %v1767 = vld [vmem:[%s4 + $0x48] sm:$0xff]
    %v1768 = vld [vmem:[%s4 + $0x50] sm:$0xff]
    %v1769 = vld [vmem:[%s4 + $0x58] sm:$0xff]
    %v1770 = vld [vmem:[%s4 + $0x60] sm:$0xff]
    %v1771 = vld [vmem:[%s4 + $0x68] sm:$0xff]
    %v1772 = vld [vmem:[%s4 + $0x70] sm:$0xff]
    %v1773 = vld [vmem:[%s4 + $0x78] sm:$0xff]
    %v1774 = vld [vmem:[#allocation2] sm:$0x1]
    %v1776 = vrot.slane %v1757, 7
    %1778 = vmatprep.subr.mxu0 0.0
    %1779 = vmatpush1.msra.mxu0 %v1758
    %1780 = vmatprep.subr.mxu0 0.0
    %1781 = vmatpush1.msra.mxu0 %v1759
    %1782 = vmatprep.subr.mxu0 0.0
    %1783 = vmatpush1.msra.mxu0 %v1760
    %1784 = vmatprep.subr.mxu0 0.0
    %1785 = vmatpush1.msra.mxu0 %v1761
    %1786 = vmatprep.subr.mxu0 0.0
    %1787 = vmatpush1.msra.mxu0 %v1762
    %1788 = vmatprep.subr.mxu0 0.0
    %1789 = vmatpush1.msra.mxu0 %v1763
    %1790 = vmatprep.subr.mxu0 0.0
    %1791 = vmatpush1.msra.mxu0 %v1764
    %1792 = vmatprep.subr.mxu0 0.0
    %1793 = vmatpush1.msra.mxu0 %v1765
    %1794 = vmatprep.subr.mxu0 0.0
    %1795 = vmatpush1.msra.mxu0 %v1766
    %1796 = vmatprep.subr.mxu0 0.0
    %1797 = vmatpush1.msra.mxu0 %v1767
    %1798 = vmatprep.subr.mxu0 0.0
    %1799 = vmatpush1.msra.mxu0 %v1768
    %1800 = vmatprep.subr.mxu0 0.0
    %1801 = vmatpush1.msra.mxu0 %v1769
    %1802 = vmatprep.subr.mxu0 0.0
    %1803 = vmatpush1.msra.mxu0 %v1770
    %1804 = vmatprep.subr.mxu0 0.0
    %1805 = vmatpush1.msra.mxu0 %v1771
    %1806 = vmatprep.subr.mxu0 0.0
    %1807 = vmatpush1.msra.mxu0 %v1772
    %1808 = vmatprep.subr.mxu0 0.0
    %1809 = vmatpush1.msra.mxu0 %v1773
    %1810 = vmatprep.subr.mxu0 0.0
    %1811 = vmatpush1.msra.mxu0 0.0
    %1812 = vmatprep.subr.mxu0 0.0
    %1813 = vmatpush1.msra.mxu0 0.0
    %1814 = vmatprep.subr.mxu0 0.0
    %1815 = vmatpush1.msra.mxu0 0.0
    %1816 = vmatprep.subr.mxu0 0.0
    %1817 = vmatpush1.msra.mxu0 0.0
    %1818 = vmatprep.subr.mxu0 0.0
    %1819 = vmatpush1.msra.mxu0 0.0
    %1820 = vmatprep.subr.mxu0 0.0
    %1821 = vmatpush1.msra.mxu0 0.0
    %1822 = vmatprep.subr.mxu0 0.0
    %1823 = vmatpush1.msra.mxu0 0.0
    %1824 = vmatprep.subr.mxu0 0.0
    %1825 = vmatpush1.msra.mxu0 0.0
    %1826 = vmatprep.subr.mxu0 0.0
    %1827 = vmatpush1.msra.mxu0 0.0
    %1828 = vmatprep.subr.mxu0 0.0
    %1829 = vmatpush1.msra.mxu0 0.0
    %1830 = vmatprep.subr.mxu0 0.0
    %1831 = vmatpush1.msra.mxu0 0.0
    %1832 = vmatprep.subr.mxu0 0.0
    %1833 = vmatpush1.msra.mxu0 0.0
    %1834 = vmatprep.subr.mxu0 0.0
    %1835 = vmatpush1.msra.mxu0 0.0
    %1836 = vmatprep.subr.mxu0 0.0
    %1837 = vmatpush1.msra.mxu0 0.0
    %1838 = vmatprep.subr.mxu0 0.0
    %1839 = vmatpush1.msra.mxu0 0.0
    %1840 = vmatprep.subr.mxu0 0.0
    %1841 = vmatpush1.msra.mxu0 0.0
    %1842 = vmatprep.mubr.f32.mxu0 0.0
    %1843 = vmatmul.mubr.f32.gmra.mrb[0].mxu0 %v1776
    %v1844 = vpop.f32.mrb[0].mxu0
    %v1845 = vadd.f32 %v1774, %v1844
    %v1846 = vpop.f32.mrb[0].mxu0
    %1847 = vdwg.mxu0
    %vm1848 = vcmask 0
    %1849 = vst.msk [vmem:[#allocation8] sm:$0x1] %vm1848, %v1845
    // Predicated region
    $region34: #{tpu_custom_call.1} parent=1 // pred_check
      _
    $region35: #{tpu_custom_call.1} parent=1 // pred_check_branch
      %1851 = sbr.rel (0) target = $region37
    $region36: #{tpu_custom_call.1} parent=1 // pred_region
      %s1853 = ssub.s32 16, 16
      %1854 = vsyncadd [#allocation5], %s1853
      %s1856 = sshll.u32 [#allocation8], 4
      %s1857 = int_to_ptr.vmem [resolvable:$true] %s1856
      %1859 = dma.vmem_to_hbm [thread:$0]  %s1857, 16, %s6, [#allocation5]
    $region37: #{tpu_custom_call.1} parent=1 // pred_fallthru
      _
    // Predicated region
    $region38: #{tpu_custom_call.1} parent=1 // pred_check
      _
    $region39: #{tpu_custom_call.1} parent=1 // pred_check_branch
      %1861 = sbr.rel (0) target = $region41
    $region40: #{tpu_custom_call.1} parent=1 // pred_region
      %1862 = dma.done [#allocation5], 16
    $region41: #{tpu_custom_call.1} parent=1 // pred_fallthru
      _
    %1863 = vsyncpa [#allocation4], 1
    %1864 = vsyncpa [#allocation7], 1
    %1865 = vsyncpa [#allocation5], 1

</llo_original>
